<compile_context>
chip_gen: v6e
topology: v6e:2x2x1
jax: 0.10.0
libtpu: 0.0.40
codegen_flags: <defaults>
</compile_context>

<pallas_src>
import functools

import jax
import jax.numpy as jnp
from jax.experimental import pallas as pl
from jax.experimental.pallas import tpu as pltpu


def _silu(x):
    return x * jax.nn.sigmoid(x)


# --------------------------------------------------------------------------------------
# Kernel 1: both gated-equivariant MLPs, fused, over tiles of whole molecules.
#   inputs : l0 [TA, F], l1 (Cartesian-major) [3, TA, F], packed weights
#   outputs: l0_out [TA, 3]  (scalar head of outnet_l0, final block has no sactivation)
#            U_wide [TA, 3*F_1] with column (d*F_1 + f) == l1_outnet[atom, d, f]
# --------------------------------------------------------------------------------------
def mlp_kernel(l0_ref, l1_ref,
               wm1_ref, ws1x_ref, ws1v_ref, bs1_ref,
               ws2_ref, bs2_ref,
               wm2_ref, w2s1s_ref, w2s1v_ref, b2s1_ref,
               w2s2_ref, b2s2_ref,
               l0o_ref, uw_ref):
    TA, F = l0_ref.shape
    H = wm1_ref.shape[1] // 4
    F1 = (wm2_ref.shape[1] - 3) // 2

    def mdot(a, w_ref):
        w = w_ref[...]
        # matmul operands may be bf16 (v6e/v7x); accumulation is always f32
        return jnp.dot(a.astype(w.dtype), w, preferred_element_type=jnp.float32)

    l0 = l0_ref[...]                                                   # [TA, F]
    # Fold the Cartesian axis into the matmul M dimension (rows ordered d*TA + atom).
    l1f = jnp.concatenate([l1_ref[0], l1_ref[1], l1_ref[2]], axis=0)   # [3TA, F]

    # ---- layer 1 of BOTH outnets (F -> H), fused columns = [A | B] ----
    mix1 = mdot(l1f, wm1_ref)                                          # [3TA, 4H] = [V_A|V_B|W_A|W_B]
    v1 = mix1[:, :2 * H]
    w1 = mix1[:, 2 * H:]
    vn1 = jnp.sqrt(v1[0:TA] ** 2 + v1[TA:2 * TA] ** 2 + v1[2 * TA:3 * TA] ** 2)  # [TA, 2H]
    x1 = _silu(mdot(l0, ws1x_ref) + mdot(vn1, ws1v_ref) + bs1_ref[...])           # [TA, 2F]
    y1 = mdot(x1, ws2_ref) + bs2_ref[...]                              # [TA, 4H] = [s_A|s_B|g_A|g_B]
    s1 = _silu(y1[:, :2 * H])                                          # hidden block sactivation=silu
    g1 = y1[:, 2 * H:]
    g1_3 = jnp.concatenate([g1, g1, g1], axis=0)                       # broadcast gate over d
    vout1 = g1_3 * w1                                                  # [3TA, 2H] = [v_A | v_B]

    # ---- layer 2 of BOTH outnets (H -> {3, F_1}), fused; unused heads dropped ----
    mix2 = mdot(vout1, wm2_ref)                                        # [3TA, 3+2F1] = [V2_A|V2_B|W2_B]
    v2 = mix2[:, :3 + F1]
    w2b = mix2[:, 3 + F1:]
    vn2 = jnp.sqrt(v2[0:TA] ** 2 + v2[TA:2 * TA] ** 2 + v2[2 * TA:3 * TA] ** 2)  # [TA, 3+F1]
    x2 = _silu(mdot(s1, w2s1s_ref) + mdot(vn2, w2s1v_ref) + b2s1_ref[...])        # [TA, 2H]
    y2 = mdot(x2, w2s2_ref) + b2s2_ref[...]                            # [TA, 3+F1] = [l0_out | gate_B]
    l0_out = y2[:, :3]                                                 # final block: sactivation=None
    g2b = y2[:, 3:]                                                    # [TA, F1]

    # l1_outnet in atom-major wide layout (column d*F1+f == l1_outnet[atom, d, f]).
    u_wide = jnp.concatenate(
        [g2b * w2b[d * TA:(d + 1) * TA, :] for d in range(3)], axis=1)  # [TA, 3*F1]

    # NOTE: these intermediate outputs are narrow (3 / 3*F_1 lanes -> masked stores) but are a
    # small fraction of the tile's traffic compared to the [3TA, F] input and [TA, 4H] matmuls.
    l0o_ref[...] = l0_out.astype(l0o_ref.dtype)
    uw_ref[...] = u_wide.astype(uw_ref.dtype)


# --------------------------------------------------------------------------------------
# Kernel 2: per-molecule Hessian assembly  H_m = diag(l0_flat_m) + U_m @ U_m^T
# --------------------------------------------------------------------------------------
def assemble_kernel(l0f_ref, u_ref, h_ref):
    TM, n3 = l0f_ref.shape                       # n3 = 3 * atoms_per_mol
    row = jax.lax.broadcasted_iota(jnp.int32, (n3, n3), 0)
    col = jax.lax.broadcasted_iota(jnp.int32, (n3, n3), 1)
    on_diag = row == col
    l0f = l0f_ref[...]
    for m in range(TM):                          # static unroll: tiny per-molecule grams
        u = u_ref[m]                             # [3A, F_1]
        gram = jax.lax.dot_general(u, u, (((1,), (1,)), ((), ())),
                                   preferred_element_type=jnp.float32)   # U @ U^T
        diag = jnp.where(on_diag, l0f[m:m + 1, :], 0.0)
        h_ref[m] = (gram + diag).astype(h_ref.dtype)


# --------------------------------------------------------------------------------------
# Host-side helpers
# --------------------------------------------------------------------------------------
def _rep_spec(arr):
    return pl.BlockSpec(arr.shape, lambda i, n=arr.ndim: (0,) * n)


def hessian_duut_forward(l0, l1, packed, atoms_per_mol, F_1, *,
                         tile_mols_mlp=8, tile_mols_hess=8,
                         matmul_dtype=jnp.float32):
    """l0: [n_atoms, F]  l1: [n_atoms, 3, F] (PyTorch layout). Returns [n_mol*3A*3A/27, 27]."""
    n_atoms, F = l0.shape
    A = atoms_per_mol
    assert n_atoms % A == 0
    n_mol = n_atoms // A
    TA = tile_mols_mlp * A
    assert TA % 8 == 0, "tile_mols_mlp * atoms_per_mol must be a multiple of 8 (pad if ragged)"
    assert n_atoms % TA == 0 and n_mol % tile_mols_hess == 0

    # Cartesian-major layout so d folds into the matmul M dimension.
    # TODO(synk): have the upstream representation emit [3, n_atoms, F] directly to avoid this
    #             extra HBM round trip of the largest input (it is on the roofline otherwise).
    l1_dm = jnp.transpose(l1, (1, 0, 2)).astype(matmul_dtype)
    l0_c = l0.astype(matmul_dtype)

    in_specs = ([pl.BlockSpec((TA, F), lambda i: (i, 0)),
                 pl.BlockSpec((3, TA, F), lambda i: (0, i, 0))]
                + [_rep_spec(w) for w in packed])

    l0o, uw = pl.pallas_call(
        mlp_kernel,
        grid=(n_atoms // TA,),
        in_specs=in_specs,
        out_specs=[pl.BlockSpec((TA, 3), lambda i: (i, 0)),
                   pl.BlockSpec((TA, 3 * F_1), lambda i: (i, 0))],
        out_shape=(jax.ShapeDtypeStruct((n_atoms, 3), jnp.float32),
                   jax.ShapeDtypeStruct((n_atoms, 3 * F_1), jnp.float32)),
        compiler_params=pltpu.CompilerParams(dimension_semantics=("parallel",)),
    )(l0_c, l1_dm, *packed)

    # Free (contiguous) reshapes into per-molecule layout matching torch's .reshape(n_atom*3, ...)
    l0f = l0o.reshape(n_mol, 3 * A)              # row = atom*3 + channel
    u3 = uw.reshape(n_mol, 3 * A, F_1)           # row = atom*3 + d

    TM = tile_mols_hess
    hess = pl.pallas_call(
        assemble_kernel,
        grid=(n_mol // TM,),
        in_specs=[pl.BlockSpec((TM, 3 * A), lambda i: (i, 0)),
                  pl.BlockSpec((TM, 3 * A, F_1), lambda i: (i, 0, 0))],
        out_specs=pl.BlockSpec((TM, 3 * A, 3 * A), lambda i: (i, 0, 0)),
        out_shape=jax.ShapeDtypeStruct((n_mol, 3 * A, 3 * A), jnp.float32),
        compiler_params=pltpu.CompilerParams(dimension_semantics=("parallel",)),
    )(l0f, u3)

    return hess.reshape(-1, 27)                  # torch: stack(...).view(-1, 27)


# --------------------------------------------------------------------------------------
# Parameters: raw (per GatedEquivariantBlock, JAX [in,out] layout) + fused packing for the kernel
# --------------------------------------------------------------------------------------
def init_block_params(key, n_sin, n_vin, n_sout, n_vout, n_hidden):
    ks = jax.random.split(key, 5)
    w = lambda k, fi, fo: jax.random.normal(k, (fi, fo), jnp.float32) / jnp.sqrt(fi)
    return dict(
        Wmix=w(ks[0], n_vin, 2 * n_vout),
        Ws1=w(ks[1], n_sin + n_vout, n_hidden),
        bs1=0.1 * jax.random.normal(ks[2], (n_hidden,), jnp.float32),
        Ws2=w(ks[3], n_hidden, n_sout + n_vout),
        bs2=0.1 * jax.random.normal(ks[4], (n_sout + n_vout,), jnp.float32),
        n_sout=n_sout, n_vout=n_vout,
    )


def init_params(key, F, F_1):
    H = F // 2
    assert H >= max(3, F_1), "requires n_in//2 >= max(3, F_1) (schnetpack hidden-width rule)"
    kA1, kA2, kB1, kB2 = jax.random.split(key, 4)
    pA1 = init_block_params(kA1, F, F, H, H, F)        # outnet_l0 hidden block (sact=silu)
    pA2 = init_block_params(kA2, H, H, 3, 3, H)        # outnet_l0 output block (sact=None)
    pB1 = init_block_params(kB1, F, F, H, H, F)        # outnet_l1 hidden block (sact=silu)
    pB2 = init_block_params(kB2, H, H, F_1, F_1, H)    # outnet_l1 output block (sact=None)
    return pA1, pA2, pB1, pB2


def pack_params(params, F, F_1, matmul_dtype=jnp.float32):
    """Fuse both outnets' layers into block-diagonal / concatenated operands (built once)."""
    pA1, pA2, pB1, pB2 = params
    H = pA1["n_vout"]
    f32 = jnp.float32

    Wm1 = jnp.concatenate([pA1["Wmix"][:, :H], pB1["Wmix"][:, :H],
                           pA1["Wmix"][:, H:], pB1["Wmix"][:, H:]], axis=1)         # [F, 4H]
    Ws1x = jnp.concatenate([pA1["Ws1"][:F, :], pB1["Ws1"][:F, :]], axis=1)           # [F, 2F]
    Ws1v = jnp.zeros((2 * H, 2 * F), f32)
    Ws1v = Ws1v.at[:H, :F].set(pA1["Ws1"][F:, :]).at[H:, F:].set(pB1["Ws1"][F:, :])  # [2H, 2F]
    bs1 = jnp.concatenate([pA1["bs1"], pB1["bs1"]]).reshape(1, 2 * F)
    Ws2 = jnp.zeros((2 * F, 4 * H), f32)
    Ws2 = (Ws2.at[:F, :H].set(pA1["Ws2"][:, :H])
              .at[:F, 2 * H:3 * H].set(pA1["Ws2"][:, H:])
              .at[F:, H:2 * H].set(pB1["Ws2"][:, :H])
              .at[F:, 3 * H:].set(pB1["Ws2"][:, H:]))                                # [2F, 4H]
    bs2 = jnp.concatenate([pA1["bs2"][:H], pB1["bs2"][:H],
                           pA1["bs2"][H:], pB1["bs2"][H:]]).reshape(1, 4 * H)

    Wm2 = jnp.zeros((2 * H, 3 + 2 * F_1), f32)         # cols [V2_A(3) | V2_B(F1) | W2_B(F1)]
    Wm2 = (Wm2.at[:H, :3].set(pA2["Wmix"][:, :3])
              .at[H:, 3:3 + F_1].set(pB2["Wmix"][:, :F_1])
              .at[H:, 3 + F_1:].set(pB2["Wmix"][:, F_1:]))
    W2s1s = jnp.zeros((2 * H, 2 * H), f32)
    W2s1s = W2s1s.at[:H, :H].set(pA2["Ws1"][:H, :]).at[H:, H:].set(pB2["Ws1"][:H, :])
    W2s1v = jnp.zeros((3 + F_1, 2 * H), f32)
    W2s1v = W2s1v.at[:3, :H].set(pA2["Ws1"][H:, :]).at[3:, H:].set(pB2["Ws1"][H:, :])
    b2s1 = jnp.concatenate([pA2["bs1"], pB2["bs1"]]).reshape(1, 2 * H)
    W2s2 = jnp.zeros((2 * H, 3 + F_1), f32)            # only the heads that are actually used
    W2s2 = W2s2.at[:H, :3].set(pA2["Ws2"][:, :3]).at[H:, 3:].set(pB2["Ws2"][:, F_1:])
    b2s2 = jnp.concatenate([pA2["bs2"][:3], pB2["bs2"][F_1:]]).reshape(1, 3 + F_1)

    cast = lambda w: w.astype(matmul_dtype)            # biases stay f32 (added post-accumulation)
    return [cast(Wm1), cast(Ws1x), cast(Ws1v), bs1, cast(Ws2), bs2,
            cast(Wm2), cast(W2s1s), cast(W2s1v), b2s1, cast(W2s2), b2s2]


# --------------------------------------------------------------------------------------
# Pure-JAX reference (mirrors the torch forward exactly)
# --------------------------------------------------------------------------------------
def _gated_block_ref(scalars, vectors, p, sactivation):
    nv, ns = p["n_vout"], p["n_sout"]
    vmix = jnp.einsum("adf,fk->adk", vectors, p["Wmix"])
    V, W = vmix[..., :nv], vmix[..., nv:]
    Vn = jnp.sqrt(jnp.sum(V ** 2, axis=1))
    ctx = jnp.concatenate([scalars, Vn], axis=-1)
    x = jax.nn.silu(ctx @ p["Ws1"] + p["bs1"])
    x = x @ p["Ws2"] + p["bs2"]
    s_out, gate = x[:, :ns], x[:, ns:]
    v_out = gate[:, None, :] * W
    if sactivation:
        s_out = jax.nn.silu(s_out)
    return s_out, v_out


def reference(l0, l1, params, atoms_per_mol):
    pA1, pA2, pB1, pB2 = params
    sA, vA = _gated_block_ref(l0, l1, pA1, True)
    l0_outnet, _ = _gated_block_ref(sA, vA, pA2, False)
    sB, vB = _gated_block_ref(l0, l1, pB1, True)
    _, l1_outnet = _gated_block_ref(sB, vB, pB2, False)
    A = atoms_per_mol
    n_mol = l0.shape[0] // A
    hessians = []
    for m in range(n_mol):
        lo = l0_outnet[m * A:(m + 1) * A].reshape(A * 3)
        U = l1_outnet[m * A:(m + 1) * A].reshape(A * 3, -1)
        hessians.append(jnp.diag(lo) + U @ U.T)
    return jnp.stack(hessians, axis=0).reshape(-1, 27)


if __name__ == "__main__":
    key = jax.random.PRNGKey(0)
    F, F_1 = 32, 6                 # n_in, F_1 (module default F_1=6)
    A = 3                          # atoms per molecule (uniform, as torch.stack requires)
    n_mol = 16
    n_atoms = n_mol * A

    k0, k1, kp = jax.random.split(key, 3)
    l0 = jax.random.normal(k0, (n_atoms, F), jnp.float32)      # scalar_representation
    l1 = jax.random.normal(k1, (n_atoms, 3, F), jnp.float32)   # vector_representation
    # atomic_numbers (Z) / positions (R) are read by the torch forward but never used; omitted.

    params = init_params(kp, F, F_1)
    ref = reference(l0, l1, params, A)

    # float32 path (tight check)
    packed = pack_params(params, F, F_1, jnp.float32)
    out = hessian_duut_forward(l0, l1, packed, A, F_1,
                               tile_mols_mlp=8, tile_mols_hess=8,
                               matmul_dtype=jnp.float32)
    out = jax.block_until_ready(out)
    assert out.shape == ref.shape == (n_mol * 3, 27)
    assert jnp.allclose(out, ref, atol=2e-3, rtol=2e-3), float(jnp.max(jnp.abs(out - ref)))

    # bf16 matmul-operand path (v6e / v7x MXU; elementwise math stays f32 inside the kernel)
    packed_bf16 = pack_params(params, F, F_1, jnp.bfloat16)
    out_bf16 = hessian_duut_forward(l0, l1, packed_bf16, A, F_1,
                                    tile_mols_mlp=8, tile_mols_hess=8,
                                    matmul_dtype=jnp.bfloat16)
    out_bf16 = jax.block_until_ready(out_bf16)
    rel = jnp.linalg.norm(out_bf16 - ref) / jnp.linalg.norm(ref)
    assert float(rel) < 0.08, float(rel)

    print("KERNEL_OK")
</pallas_src>

<mosaic_0001>
module attributes {stable_mosaic.version = 11 : i64} {
  func.func @mlp_kernel(%arg0: i32, %arg1: memref<24x32xf32, #tpu.memory_space<vmem>>, %arg2: memref<3x24x32xf32, #tpu.memory_space<vmem>>, %arg3: memref<32x64xf32, #tpu.memory_space<vmem>>, %arg4: memref<32x64xf32, #tpu.memory_space<vmem>>, %arg5: memref<32x64xf32, #tpu.memory_space<vmem>>, %arg6: memref<1x64xf32, #tpu.memory_space<vmem>>, %arg7: memref<64x64xf32, #tpu.memory_space<vmem>>, %arg8: memref<1x64xf32, #tpu.memory_space<vmem>>, %arg9: memref<32x15xf32, #tpu.memory_space<vmem>>, %arg10: memref<32x32xf32, #tpu.memory_space<vmem>>, %arg11: memref<9x32xf32, #tpu.memory_space<vmem>>, %arg12: memref<1x32xf32, #tpu.memory_space<vmem>>, %arg13: memref<32x9xf32, #tpu.memory_space<vmem>>, %arg14: memref<1x9xf32, #tpu.memory_space<vmem>>, %arg15: memref<24x3xf32, #tpu.memory_space<vmem>>, %arg16: memref<24x18xf32, #tpu.memory_space<vmem>>) attributes {dimension_semantics = [#tpu.dimension_semantics<parallel>], iteration_bounds = array<i64: 2>, scalar_prefetch = 0 : i64, scratch_operands = 0 : i64, tpu.core_type = #tpu.core_type<tc>, window_params = [{transform_indices = @transform_0, window_bounds = array<i64: 24, 32>}, {transform_indices = @transform_1, window_bounds = array<i64: 3, 24, 32>}, {pipeline_mode = #tpu.pipeline_mode<synchronous>, transform_indices = @transform_2, window_bounds = array<i64: 32, 64>}, {pipeline_mode = #tpu.pipeline_mode<synchronous>, transform_indices = @transform_3, window_bounds = array<i64: 32, 64>}, {pipeline_mode = #tpu.pipeline_mode<synchronous>, transform_indices = @transform_4, window_bounds = array<i64: 32, 64>}, {pipeline_mode = #tpu.pipeline_mode<synchronous>, transform_indices = @transform_5, window_bounds = array<i64: 1, 64>}, {pipeline_mode = #tpu.pipeline_mode<synchronous>, transform_indices = @transform_6, window_bounds = array<i64: 64, 64>}, {pipeline_mode = #tpu.pipeline_mode<synchronous>, transform_indices = @transform_7, window_bounds = array<i64: 1, 64>}, {pipeline_mode = #tpu.pipeline_mode<synchronous>, transform_indices = @transform_8, window_bounds = array<i64: 32, 15>}, {pipeline_mode = #tpu.pipeline_mode<synchronous>, transform_indices = @transform_9, window_bounds = array<i64: 32, 32>}, {pipeline_mode = #tpu.pipeline_mode<synchronous>, transform_indices = @transform_10, window_bounds = array<i64: 9, 32>}, {pipeline_mode = #tpu.pipeline_mode<synchronous>, transform_indices = @transform_11, window_bounds = array<i64: 1, 32>}, {pipeline_mode = #tpu.pipeline_mode<synchronous>, transform_indices = @transform_12, window_bounds = array<i64: 32, 9>}, {pipeline_mode = #tpu.pipeline_mode<synchronous>, transform_indices = @transform_13, window_bounds = array<i64: 1, 9>}, {transform_indices = @transform_14, window_bounds = array<i64: 24, 3>}, {transform_indices = @transform_15, window_bounds = array<i64: 24, 18>}]} {
    %c0 = arith.constant 0 : index
    %c0_0 = arith.constant 0 : index
    %0 = vector.load %arg1[%c0, %c0_0] : memref<24x32xf32, #tpu.memory_space<vmem>>, vector<24x32xf32>
    %c0_1 = arith.constant 0 : index
    %c0_2 = arith.constant 0 : index
    %c0_3 = arith.constant 0 : index
    %1 = vector.load %arg2[%c0_1, %c0_2, %c0_3] : memref<3x24x32xf32, #tpu.memory_space<vmem>>, vector<1x24x32xf32>
    %2 = vector.shape_cast %1 : vector<1x24x32xf32> to vector<24x32xf32>
    %c1 = arith.constant 1 : index
    %c0_4 = arith.constant 0 : index
    %c0_5 = arith.constant 0 : index
    %3 = vector.load %arg2[%c1, %c0_4, %c0_5] : memref<3x24x32xf32, #tpu.memory_space<vmem>>, vector<1x24x32xf32>
    %4 = vector.shape_cast %3 : vector<1x24x32xf32> to vector<24x32xf32>
    %c2 = arith.constant 2 : index
    %c0_6 = arith.constant 0 : index
    %c0_7 = arith.constant 0 : index
    %5 = vector.load %arg2[%c2, %c0_6, %c0_7] : memref<3x24x32xf32, #tpu.memory_space<vmem>>, vector<1x24x32xf32>
    %6 = vector.shape_cast %5 : vector<1x24x32xf32> to vector<24x32xf32>
    %7 = tpu.concatenate %2, %4, %6 in 0 : vector<24x32xf32>, vector<24x32xf32>, vector<24x32xf32> -> vector<72x32xf32>
    %c0_8 = arith.constant 0 : index
    %c0_9 = arith.constant 0 : index
    %8 = vector.load %arg3[%c0_8, %c0_9] : memref<32x64xf32, #tpu.memory_space<vmem>>, vector<32x64xf32>
    %cst = arith.constant dense<0.000000e+00> : vector<72x64xf32>
    %9 = tpu.matmul %7, %8, %cst {dimension_numbers = #tpu.dot_dimension_numbers<[1], [0], [0], [1], [0, 0, 1, 1], [], []>} : vector<72x32xf32>, vector<32x64xf32>, vector<72x64xf32> -> vector<72x64xf32>
    %10 = vector.extract_strided_slice %9 {offsets = [0, 0], sizes = [72, 32], strides = [1, 1]} : vector<72x64xf32> to vector<72x32xf32>
    %11 = vector.extract_strided_slice %9 {offsets = [0, 32], sizes = [72, 32], strides = [1, 1]} : vector<72x64xf32> to vector<72x32xf32>
    %12 = vector.extract_strided_slice %10 {offsets = [0, 0], sizes = [24, 32], strides = [1, 1]} : vector<72x32xf32> to vector<24x32xf32>
    %13 = arith.mulf %12, %12 : vector<24x32xf32>
    %14 = vector.extract_strided_slice %10 {offsets = [24, 0], sizes = [24, 32], strides = [1, 1]} : vector<72x32xf32> to vector<24x32xf32>
    %15 = arith.mulf %14, %14 : vector<24x32xf32>
    %16 = arith.addf %13, %15 : vector<24x32xf32>
    %17 = vector.extract_strided_slice %10 {offsets = [48, 0], sizes = [24, 32], strides = [1, 1]} : vector<72x32xf32> to vector<24x32xf32>
    %18 = arith.mulf %17, %17 : vector<24x32xf32>
    %19 = arith.addf %16, %18 : vector<24x32xf32>
    %20 = math.sqrt %19 : vector<24x32xf32>
    %c0_10 = arith.constant 0 : index
    %c0_11 = arith.constant 0 : index
    %21 = vector.load %arg4[%c0_10, %c0_11] : memref<32x64xf32, #tpu.memory_space<vmem>>, vector<32x64xf32>
    %cst_12 = arith.constant dense<0.000000e+00> : vector<24x64xf32>
    %22 = tpu.matmul %0, %21, %cst_12 {dimension_numbers = #tpu.dot_dimension_numbers<[1], [0], [0], [1], [0, 0, 1, 1], [], []>} : vector<24x32xf32>, vector<32x64xf32>, vector<24x64xf32> -> vector<24x64xf32>
    %c0_13 = arith.constant 0 : index
    %c0_14 = arith.constant 0 : index
    %23 = vector.load %arg5[%c0_13, %c0_14] : memref<32x64xf32, #tpu.memory_space<vmem>>, vector<32x64xf32>
    %cst_15 = arith.constant dense<0.000000e+00> : vector<24x64xf32>
    %24 = tpu.matmul %20, %23, %cst_15 {dimension_numbers = #tpu.dot_dimension_numbers<[1], [0], [0], [1], [0, 0, 1, 1], [], []>} : vector<24x32xf32>, vector<32x64xf32>, vector<24x64xf32> -> vector<24x64xf32>
    %25 = arith.addf %22, %24 : vector<24x64xf32>
    %c0_16 = arith.constant 0 : index
    %c0_17 = arith.constant 0 : index
    %26 = vector.load %arg6[%c0_16, %c0_17] : memref<1x64xf32, #tpu.memory_space<vmem>>, vector<1x64xf32>
    %27 = vector.broadcast %26 : vector<1x64xf32> to vector<24x64xf32>
    %28 = arith.addf %25, %27 : vector<24x64xf32>
    %29 = arith.negf %28 : vector<24x64xf32>
    %30 = math.exp %29 : vector<24x64xf32>
    %cst_18 = arith.constant 1.000000e+00 : f32
    %31 = vector.broadcast %cst_18 : f32 to vector<24x64xf32>
    %32 = arith.addf %31, %30 : vector<24x64xf32>
    %33 = arith.divf %31, %32 : vector<24x64xf32>
    %34 = arith.mulf %28, %33 : vector<24x64xf32>
    %c0_19 = arith.constant 0 : index
    %c0_20 = arith.constant 0 : index
    %35 = vector.load %arg7[%c0_19, %c0_20] : memref<64x64xf32, #tpu.memory_space<vmem>>, vector<64x64xf32>
    %cst_21 = arith.constant dense<0.000000e+00> : vector<24x64xf32>
    %36 = tpu.matmul %34, %35, %cst_21 {dimension_numbers = #tpu.dot_dimension_numbers<[1], [0], [0], [1], [0, 0, 1, 1], [], []>} : vector<24x64xf32>, vector<64x64xf32>, vector<24x64xf32> -> vector<24x64xf32>
    %c0_22 = arith.constant 0 : index
    %c0_23 = arith.constant 0 : index
    %37 = vector.load %arg8[%c0_22, %c0_23] : memref<1x64xf32, #tpu.memory_space<vmem>>, vector<1x64xf32>
    %38 = vector.broadcast %37 : vector<1x64xf32> to vector<24x64xf32>
    %39 = arith.addf %36, %38 : vector<24x64xf32>
    %40 = vector.extract_strided_slice %39 {offsets = [0, 0], sizes = [24, 32], strides = [1, 1]} : vector<24x64xf32> to vector<24x32xf32>
    %41 = arith.negf %40 : vector<24x32xf32>
    %42 = math.exp %41 : vector<24x32xf32>
    %cst_24 = arith.constant 1.000000e+00 : f32
    %43 = vector.broadcast %cst_24 : f32 to vector<24x32xf32>
    %44 = arith.addf %43, %42 : vector<24x32xf32>
    %45 = arith.divf %43, %44 : vector<24x32xf32>
    %46 = arith.mulf %40, %45 : vector<24x32xf32>
    %47 = vector.extract_strided_slice %39 {offsets = [0, 32], sizes = [24, 32], strides = [1, 1]} : vector<24x64xf32> to vector<24x32xf32>
    %48 = tpu.concatenate %47, %47, %47 in 0 : vector<24x32xf32>, vector<24x32xf32>, vector<24x32xf32> -> vector<72x32xf32>
    %49 = arith.mulf %48, %11 : vector<72x32xf32>
    %c0_25 = arith.constant 0 : index
    %c0_26 = arith.constant 0 : index
    %50 = vector.load %arg9[%c0_25, %c0_26] : memref<32x15xf32, #tpu.memory_space<vmem>>, vector<32x15xf32>
    %cst_27 = arith.constant dense<0.000000e+00> : vector<72x15xf32>
    %51 = tpu.matmul %49, %50, %cst_27 {dimension_numbers = #tpu.dot_dimension_numbers<[1], [0], [0], [1], [0, 0, 1, 1], [], []>} : vector<72x32xf32>, vector<32x15xf32>, vector<72x15xf32> -> vector<72x15xf32>
    %52 = vector.extract_strided_slice %51 {offsets = [0, 0], sizes = [72, 9], strides = [1, 1]} : vector<72x15xf32> to vector<72x9xf32>
    %53 = vector.extract_strided_slice %51 {offsets = [0, 9], sizes = [72, 6], strides = [1, 1]} : vector<72x15xf32> to vector<72x6xf32>
    %54 = vector.extract_strided_slice %52 {offsets = [0, 0], sizes = [24, 9], strides = [1, 1]} : vector<72x9xf32> to vector<24x9xf32>
    %55 = arith.mulf %54, %54 : vector<24x9xf32>
    %56 = vector.extract_strided_slice %52 {offsets = [24, 0], sizes = [24, 9], strides = [1, 1]} : vector<72x9xf32> to vector<24x9xf32>
    %57 = arith.mulf %56, %56 : vector<24x9xf32>
    %58 = arith.addf %55, %57 : vector<24x9xf32>
    %59 = vector.extract_strided_slice %52 {offsets = [48, 0], sizes = [24, 9], strides = [1, 1]} : vector<72x9xf32> to vector<24x9xf32>
    %60 = arith.mulf %59, %59 : vector<24x9xf32>
    %61 = arith.addf %58, %60 : vector<24x9xf32>
    %62 = math.sqrt %61 : vector<24x9xf32>
    %c0_28 = arith.constant 0 : index
    %c0_29 = arith.constant 0 : index
    %63 = vector.load %arg10[%c0_28, %c0_29] : memref<32x32xf32, #tpu.memory_space<vmem>>, vector<32x32xf32>
    %cst_30 = arith.constant dense<0.000000e+00> : vector<24x32xf32>
    %64 = tpu.matmul %46, %63, %cst_30 {dimension_numbers = #tpu.dot_dimension_numbers<[1], [0], [0], [1], [0, 0, 1, 1], [], []>} : vector<24x32xf32>, vector<32x32xf32>, vector<24x32xf32> -> vector<24x32xf32>
    %c0_31 = arith.constant 0 : index
    %c0_32 = arith.constant 0 : index
    %65 = vector.load %arg11[%c0_31, %c0_32] : memref<9x32xf32, #tpu.memory_space<vmem>>, vector<9x32xf32>
    %cst_33 = arith.constant dense<0.000000e+00> : vector<24x32xf32>
    %66 = tpu.matmul %62, %65, %cst_33 {dimension_numbers = #tpu.dot_dimension_numbers<[1], [0], [0], [1], [0, 0, 1, 1], [], []>} : vector<24x9xf32>, vector<9x32xf32>, vector<24x32xf32> -> vector<24x32xf32>
    %67 = arith.addf %64, %66 : vector<24x32xf32>
    %c0_34 = arith.constant 0 : index
    %c0_35 = arith.constant 0 : index
    %68 = vector.load %arg12[%c0_34, %c0_35] : memref<1x32xf32, #tpu.memory_space<vmem>>, vector<1x32xf32>
    %69 = vector.broadcast %68 : vector<1x32xf32> to vector<24x32xf32>
    %70 = arith.addf %67, %69 : vector<24x32xf32>
    %71 = arith.negf %70 : vector<24x32xf32>
    %72 = math.exp %71 : vector<24x32xf32>
    %cst_36 = arith.constant 1.000000e+00 : f32
    %73 = vector.broadcast %cst_36 : f32 to vector<24x32xf32>
    %74 = arith.addf %73, %72 : vector<24x32xf32>
    %75 = arith.divf %73, %74 : vector<24x32xf32>
    %76 = arith.mulf %70, %75 : vector<24x32xf32>
    %c0_37 = arith.constant 0 : index
    %c0_38 = arith.constant 0 : index
    %77 = vector.load %arg13[%c0_37, %c0_38] : memref<32x9xf32, #tpu.memory_space<vmem>>, vector<32x9xf32>
    %cst_39 = arith.constant dense<0.000000e+00> : vector<24x9xf32>
    %78 = tpu.matmul %76, %77, %cst_39 {dimension_numbers = #tpu.dot_dimension_numbers<[1], [0], [0], [1], [0, 0, 1, 1], [], []>} : vector<24x32xf32>, vector<32x9xf32>, vector<24x9xf32> -> vector<24x9xf32>
    %c0_40 = arith.constant 0 : index
    %c0_41 = arith.constant 0 : index
    %79 = vector.load %arg14[%c0_40, %c0_41] : memref<1x9xf32, #tpu.memory_space<vmem>>, vector<1x9xf32>
    %80 = vector.broadcast %79 : vector<1x9xf32> to vector<24x9xf32>
    %81 = arith.addf %78, %80 : vector<24x9xf32>
    %82 = vector.extract_strided_slice %81 {offsets = [0, 0], sizes = [24, 3], strides = [1, 1]} : vector<24x9xf32> to vector<24x3xf32>
    %83 = vector.extract_strided_slice %81 {offsets = [0, 3], sizes = [24, 6], strides = [1, 1]} : vector<24x9xf32> to vector<24x6xf32>
    %84 = vector.extract_strided_slice %53 {offsets = [0, 0], sizes = [24, 6], strides = [1, 1]} : vector<72x6xf32> to vector<24x6xf32>
    %85 = arith.mulf %83, %84 : vector<24x6xf32>
    %86 = vector.extract_strided_slice %53 {offsets = [24, 0], sizes = [24, 6], strides = [1, 1]} : vector<72x6xf32> to vector<24x6xf32>
    %87 = arith.mulf %83, %86 : vector<24x6xf32>
    %88 = vector.extract_strided_slice %53 {offsets = [48, 0], sizes = [24, 6], strides = [1, 1]} : vector<72x6xf32> to vector<24x6xf32>
    %89 = arith.mulf %83, %88 : vector<24x6xf32>
    %90 = tpu.concatenate %85, %87, %89 in 1 : vector<24x6xf32>, vector<24x6xf32>, vector<24x6xf32> -> vector<24x18xf32>
    %c0_42 = arith.constant 0 : index
    %c0_43 = arith.constant 0 : index
    %91 = vector.load %arg15[%c0_42, %c0_43] : memref<24x3xf32, #tpu.memory_space<vmem>>, vector<24x3xf32>
    tpu.vector_store %arg15[%c0_42, %c0_43], %82 {strides = array<i32>} : memref<24x3xf32, #tpu.memory_space<vmem>>, vector<24x3xf32>,
    %c0_44 = arith.constant 0 : index
    %c0_45 = arith.constant 0 : index
    %92 = vector.load %arg16[%c0_44, %c0_45] : memref<24x18xf32, #tpu.memory_space<vmem>>, vector<24x18xf32>
    tpu.vector_store %arg16[%c0_44, %c0_45], %90 {strides = array<i32>} : memref<24x18xf32, #tpu.memory_space<vmem>>, vector<24x18xf32>,
    return
  }
  func.func @transform_0(%arg0: i32) -> (i32, i32) {
    %c0_i32 = arith.constant 0 : i32
    %c0_i32_0 = arith.constant 0 : i32
    return %arg0, %c0_i32 : i32, i32
  }
  func.func @transform_1(%arg0: i32) -> (i32, i32, i32) {
    %c0_i32 = arith.constant 0 : i32
    %c0_i32_0 = arith.constant 0 : i32
    %c0_i32_1 = arith.constant 0 : i32
    return %c0_i32, %arg0, %c0_i32_0 : i32, i32, i32
  }
  func.func @transform_2(%arg0: i32) -> (i32, i32) {
    %c0_i32 = arith.constant 0 : i32
    %c0_i32_0 = arith.constant 0 : i32
    %c0_i32_1 = arith.constant 0 : i32
    return %c0_i32, %c0_i32_0 : i32, i32
  }
  func.func @transform_3(%arg0: i32) -> (i32, i32) {
    %c0_i32 = arith.constant 0 : i32
    %c0_i32_0 = arith.constant 0 : i32
    %c0_i32_1 = arith.constant 0 : i32
    return %c0_i32, %c0_i32_0 : i32, i32
  }
  func.func @transform_4(%arg0: i32) -> (i32, i32) {
    %c0_i32 = arith.constant 0 : i32
    %c0_i32_0 = arith.constant 0 : i32
    %c0_i32_1 = arith.constant 0 : i32
    return %c0_i32, %c0_i32_0 : i32, i32
  }
  func.func @transform_5(%arg0: i32) -> (i32, i32) {
    %c0_i32 = arith.constant 0 : i32
    %c0_i32_0 = arith.constant 0 : i32
    %c0_i32_1 = arith.constant 0 : i32
    return %c0_i32, %c0_i32_0 : i32, i32
  }
  func.func @transform_6(%arg0: i32) -> (i32, i32) {
    %c0_i32 = arith.constant 0 : i32
    %c0_i32_0 = arith.constant 0 : i32
    %c0_i32_1 = arith.constant 0 : i32
    return %c0_i32, %c0_i32_0 : i32, i32
  }
  func.func @transform_7(%arg0: i32) -> (i32, i32) {
    %c0_i32 = arith.constant 0 : i32
    %c0_i32_0 = arith.constant 0 : i32
    %c0_i32_1 = arith.constant 0 : i32
    return %c0_i32, %c0_i32_0 : i32, i32
  }
  func.func @transform_8(%arg0: i32) -> (i32, i32) {
    %c0_i32 = arith.constant 0 : i32
    %c0_i32_0 = arith.constant 0 : i32
    %c0_i32_1 = arith.constant 0 : i32
    return %c0_i32, %c0_i32_0 : i32, i32
  }
  func.func @transform_9(%arg0: i32) -> (i32, i32) {
    %c0_i32 = arith.constant 0 : i32
    %c0_i32_0 = arith.constant 0 : i32
    %c0_i32_1 = arith.constant 0 : i32
    return %c0_i32, %c0_i32_0 : i32, i32
  }
  func.func @transform_10(%arg0: i32) -> (i32, i32) {
    %c0_i32 = arith.constant 0 : i32
    %c0_i32_0 = arith.constant 0 : i32
    %c0_i32_1 = arith.constant 0 : i32
    return %c0_i32, %c0_i32_0 : i32, i32
  }
  func.func @transform_11(%arg0: i32) -> (i32, i32) {
    %c0_i32 = arith.constant 0 : i32
    %c0_i32_0 = arith.constant 0 : i32
    %c0_i32_1 = arith.constant 0 : i32
    return %c0_i32, %c0_i32_0 : i32, i32
  }
  func.func @transform_12(%arg0: i32) -> (i32, i32) {
    %c0_i32 = arith.constant 0 : i32
    %c0_i32_0 = arith.constant 0 : i32
    %c0_i32_1 = arith.constant 0 : i32
    return %c0_i32, %c0_i32_0 : i32, i32
  }
  func.func @transform_13(%arg0: i32) -> (i32, i32) {
    %c0_i32 = arith.constant 0 : i32
    %c0_i32_0 = arith.constant 0 : i32
    %c0_i32_1 = arith.constant 0 : i32
    return %c0_i32, %c0_i32_0 : i32, i32
  }
  func.func @transform_14(%arg0: i32) -> (i32, i32) {
    %c0_i32 = arith.constant 0 : i32
    %c0_i32_0 = arith.constant 0 : i32
    return %arg0, %c0_i32 : i32, i32
  }
  func.func @transform_15(%arg0: i32) -> (i32, i32) {
    %c0_i32 = arith.constant 0 : i32
    %c0_i32_0 = arith.constant 0 : i32
    return %arg0, %c0_i32 : i32, i32
  }
}

</mosaic_0001>

<llo_original>
// kernel: tpu_custom_call.1
$region0: #{tpu_custom_call.1}
  #allocation0 [shape = 'u32[]', space=smem, size = 0x4, offset = 0x4, fixed_abs, tag = 'smem constant byte address 0x4 - core index']
  #allocation1 [shape = 'u32[144,128]{1,0:T(1,128)}', space=vmem, size = 0x12000, scoped, tag = 'internal scratch']
  %s0 = inlined_call_operand.vmem [shape: f32[48,32], index: 0, kind: input, shape index: {}]
  %s1 = inlined_call_operand.vmem [shape: f32[3,48,32], index: 1, kind: input, shape index: {}]
  %s2 = inlined_call_operand.vmem [shape: f32[32,64], index: 2, kind: input, shape index: {}]
  %s3 = inlined_call_operand.vmem [shape: f32[32,64], index: 3, kind: input, shape index: {}]
  %s4 = inlined_call_operand.vmem [shape: f32[32,64], index: 4, kind: input, shape index: {}]
  %s5 = inlined_call_operand.vmem [shape: f32[1,64], index: 5, kind: input, shape index: {}]
  %s6 = inlined_call_operand.vmem [shape: f32[64,64], index: 6, kind: input, shape index: {}]
  %s7 = inlined_call_operand.vmem [shape: f32[1,64], index: 7, kind: input, shape index: {}]
  %s8 = inlined_call_operand.vmem [shape: f32[32,15], index: 8, kind: input, shape index: {}]
  %s9 = inlined_call_operand.vmem [shape: f32[32,32], index: 9, kind: input, shape index: {}]
  %s10 = inlined_call_operand.vmem [shape: f32[9,32], index: 10, kind: input, shape index: {}]
  %s11 = inlined_call_operand.vmem [shape: f32[1,32], index: 11, kind: input, shape index: {}]
  %s12 = inlined_call_operand.vmem [shape: f32[32,9], index: 12, kind: input, shape index: {}]
  %s13 = inlined_call_operand.vmem [shape: f32[1,9], index: 13, kind: input, shape index: {}]
  %s14 = inlined_call_operand.vmem [shape: f32[48,3], index: 14, kind: output, shape index: {0}]
  %s15 = inlined_call_operand.vmem [shape: f32[48,18], index: 15, kind: output, shape index: {1}]
  %16 = xla_tuple %s14, %s15
  %s17 = sld [smem:[#allocation0]]
  $region135: #{tpu_custom_call.1} parent=0
    _
  %s19 = ssub.s32 1, %s17
  %s20 = scalar_select 0, %s19, %s17
  $region1: #{tpu_custom_call.1} parent=0
    #allocation2 [shape = 'u8[73728]{0}', space=vmem, size = 0x12000, scoped, tag = 'input window, operand 1']
    loop: start=0, step=1, limit=4
    $region2: #{tpu_custom_call.1} parent=1 // loop_pre_header
      _
    $region3: #{tpu_custom_call.1} parent=1 // loop_header
      %s22 = sphi 0, %s26
      %p23 = scmp.ge.s32.totalorder %s22, 4
      %s32 = sphi 0, %s34
      %s35 = sphi 0, %s32
      %s36 = sphi 0, %s35
      %s52 = sphi 0, %s36
      %s58 = sphi 0, %s60
      %s61 = sphi 0, %s58
      %s62 = sphi 0, %s61
      %s78 = sphi 0, %s62
      %s82 = sphi 0, %s82
      %s84 = sphi 0, %s82
      %s85 = sphi 0, %s84
      %s99 = sphi 0, %s85
      %s103 = sphi 0, %s103
      %s105 = sphi 0, %s103
      %s106 = sphi 0, %s105
      %s120 = sphi 0, %s106
      %s124 = sphi 0, %s124
      %s126 = sphi 0, %s124
      %s127 = sphi 0, %s126
      %s141 = sphi 0, %s127
      %s145 = sphi 0, %s145
      %s147 = sphi 0, %s145
      %s148 = sphi 0, %s147
      %s162 = sphi 0, %s148
      %s166 = sphi 0, %s166
      %s168 = sphi 0, %s166
      %s169 = sphi 0, %s168
      %s183 = sphi 0, %s169
      %s187 = sphi 0, %s187
      %s189 = sphi 0, %s187
      %s190 = sphi 0, %s189
      %s204 = sphi 0, %s190
      %s208 = sphi 0, %s208
      %s210 = sphi 0, %s208
      %s211 = sphi 0, %s210
      %s225 = sphi 0, %s211
      %s229 = sphi 0, %s229
      %s231 = sphi 0, %s229
      %s232 = sphi 0, %s231
      %s246 = sphi 0, %s232
      %s250 = sphi 0, %s250
      %s252 = sphi 0, %s250
      %s253 = sphi 0, %s252
      %s267 = sphi 0, %s253
      %s271 = sphi 0, %s271
      %s273 = sphi 0, %s271
      %s274 = sphi 0, %s273
      %s288 = sphi 0, %s274
      %s292 = sphi 0, %s292
      %s294 = sphi 0, %s292
      %s295 = sphi 0, %s294
      %s309 = sphi 0, %s295
      %s313 = sphi 0, %s313
      %s315 = sphi 0, %s313
      %s316 = sphi 0, %s315
      %s330 = sphi 0, %s316
      %s336 = sphi 0, %s338
      %s339 = sphi 0, %s336
      %s340 = sphi 0, %s339
      %s356 = sphi 0, %s340
      %s362 = sphi 0, %s364
      %s365 = sphi 0, %s362
      %s366 = sphi 0, %s365
      %s382 = sphi 0, %s366
    $region4: #{tpu_custom_call.1} parent=1 // loop_header_branch
      %25 = sbr.rel (%p23) target = $region8
    $region5: #{tpu_custom_call.1} parent=1 // loop_body
      %s27 = ssub.s32 %s22, 1
      %s28 = ssub.s32 %s22, 2
      %s29 = sadd.s32 %s22, 1
      %s30 = ssub.s32 %s22, %s29
      %p31 = scmp.eq.s32.totalorder %s30, 0
      %s33 = sadd.s32 %s32, 1
      %s34 = scalar_select %p31, %s32, %s33
      %p37 = pneg %p31
      %p38 = scmp.eq.s32.totalorder %s22, 1
      %p39 = por %p37, %p38
      %p40 = scmp.ne.s32.totalorder %s32, %s35
      %p41 = scmp.eq.s32.totalorder %s22, 0
      %p42 = por %p40, %p41
      %p43 = scmp.ne.s32.totalorder %s32, %s35
      %p44 = scmp.eq.s32.totalorder %s27, 1
      %p45 = por %p43, %p44
      %p46 = scmp.ne.s32.totalorder %s35, %s36
      %p47 = scmp.eq.s32.totalorder %s27, 0
      %p48 = por %p46, %p47
      %p49 = scmp.ne.s32.totalorder %s35, %s36
      %p50 = scmp.eq.s32.totalorder %s28, 1
      %p51 = por %p49, %p50
      %p53 = scmp.ne.s32.totalorder %s36, %s52
      %p54 = scmp.eq.s32.totalorder %s28, 0
      %p55 = por %p53, %p54
      %s56 = ssub.s32 %s22, %s29
      %p57 = scmp.eq.s32.totalorder %s56, 0
      %s59 = sadd.s32 %s58, 1
      %s60 = scalar_select %p57, %s58, %s59
      %p63 = pneg %p57
      %p64 = scmp.eq.s32.totalorder %s22, 1
      %p65 = por %p63, %p64
      %p66 = scmp.ne.s32.totalorder %s58, %s61
      %p67 = scmp.eq.s32.totalorder %s22, 0
      %p68 = por %p66, %p67
      %p69 = scmp.ne.s32.totalorder %s58, %s61
      %p70 = scmp.eq.s32.totalorder %s27, 1
      %p71 = por %p69, %p70
      %p72 = scmp.ne.s32.totalorder %s61, %s62
      %p73 = scmp.eq.s32.totalorder %s27, 0
      %p74 = por %p72, %p73
      %p75 = scmp.ne.s32.totalorder %s61, %s62
      %p76 = scmp.eq.s32.totalorder %s28, 1
      %p77 = por %p75, %p76
      %p79 = scmp.ne.s32.totalorder %s62, %s78
      %p80 = scmp.eq.s32.totalorder %s28, 0
      %p81 = por %p79, %p80
      %s83 = sadd.s32 %s82, 1
      %p86 = scmp.eq.s32.totalorder %s22, 1
      %p87 = scmp.ne.s32.totalorder %s82, %s84
      %p88 = scmp.eq.s32.totalorder %s22, 0
      %p89 = por %p87, %p88
      %p90 = scmp.ne.s32.totalorder %s82, %s84
      %p91 = scmp.eq.s32.totalorder %s27, 1
      %p92 = por %p90, %p91
      %p93 = scmp.ne.s32.totalorder %s84, %s85
      %p94 = scmp.eq.s32.totalorder %s27, 0
      %p95 = por %p93, %p94
      %p96 = scmp.ne.s32.totalorder %s84, %s85
      %p97 = scmp.eq.s32.totalorder %s28, 1
      %p98 = por %p96, %p97
      %p100 = scmp.ne.s32.totalorder %s85, %s99
      %p101 = scmp.eq.s32.totalorder %s28, 0
      %p102 = por %p100, %p101
      %s104 = sadd.s32 %s103, 1
      %p107 = scmp.eq.s32.totalorder %s22, 1
      %p108 = scmp.ne.s32.totalorder %s103, %s105
      %p109 = scmp.eq.s32.totalorder %s22, 0
      %p110 = por %p108, %p109
      %p111 = scmp.ne.s32.totalorder %s103, %s105
      %p112 = scmp.eq.s32.totalorder %s27, 1
      %p113 = por %p111, %p112
      %p114 = scmp.ne.s32.totalorder %s105, %s106
      %p115 = scmp.eq.s32.totalorder %s27, 0
      %p116 = por %p114, %p115
      %p117 = scmp.ne.s32.totalorder %s105, %s106
      %p118 = scmp.eq.s32.totalorder %s28, 1
      %p119 = por %p117, %p118
      %p121 = scmp.ne.s32.totalorder %s106, %s120
      %p122 = scmp.eq.s32.totalorder %s28, 0
      %p123 = por %p121, %p122
      %s125 = sadd.s32 %s124, 1
      %p128 = scmp.eq.s32.totalorder %s22, 1
      %p129 = scmp.ne.s32.totalorder %s124, %s126
      %p130 = scmp.eq.s32.totalorder %s22, 0
      %p131 = por %p129, %p130
      %p132 = scmp.ne.s32.totalorder %s124, %s126
      %p133 = scmp.eq.s32.totalorder %s27, 1
      %p134 = por %p132, %p133
      %p135 = scmp.ne.s32.totalorder %s126, %s127
      %p136 = scmp.eq.s32.totalorder %s27, 0
      %p137 = por %p135, %p136
      %p138 = scmp.ne.s32.totalorder %s126, %s127
      %p139 = scmp.eq.s32.totalorder %s28, 1
      %p140 = por %p138, %p139
      %p142 = scmp.ne.s32.totalorder %s127, %s141
      %p143 = scmp.eq.s32.totalorder %s28, 0
      %p144 = por %p142, %p143
      %s146 = sadd.s32 %s145, 1
      %p149 = scmp.eq.s32.totalorder %s22, 1
      %p150 = scmp.ne.s32.totalorder %s145, %s147
      %p151 = scmp.eq.s32.totalorder %s22, 0
      %p152 = por %p150, %p151
      %p153 = scmp.ne.s32.totalorder %s145, %s147
      %p154 = scmp.eq.s32.totalorder %s27, 1
      %p155 = por %p153, %p154
      %p156 = scmp.ne.s32.totalorder %s147, %s148
      %p157 = scmp.eq.s32.totalorder %s27, 0
      %p158 = por %p156, %p157
      %p159 = scmp.ne.s32.totalorder %s147, %s148
      %p160 = scmp.eq.s32.totalorder %s28, 1
      %p161 = por %p159, %p160
      %p163 = scmp.ne.s32.totalorder %s148, %s162
      %p164 = scmp.eq.s32.totalorder %s28, 0
      %p165 = por %p163, %p164
      %s167 = sadd.s32 %s166, 1
      %p170 = scmp.eq.s32.totalorder %s22, 1
      %p171 = scmp.ne.s32.totalorder %s166, %s168
      %p172 = scmp.eq.s32.totalorder %s22, 0
      %p173 = por %p171, %p172
      %p174 = scmp.ne.s32.totalorder %s166, %s168
      %p175 = scmp.eq.s32.totalorder %s27, 1
      %p176 = por %p174, %p175
      %p177 = scmp.ne.s32.totalorder %s168, %s169
      %p178 = scmp.eq.s32.totalorder %s27, 0
      %p179 = por %p177, %p178
      %p180 = scmp.ne.s32.totalorder %s168, %s169
      %p181 = scmp.eq.s32.totalorder %s28, 1
      %p182 = por %p180, %p181
      %p184 = scmp.ne.s32.totalorder %s169, %s183
      %p185 = scmp.eq.s32.totalorder %s28, 0
      %p186 = por %p184, %p185
      %s188 = sadd.s32 %s187, 1
      %p191 = scmp.eq.s32.totalorder %s22, 1
      %p192 = scmp.ne.s32.totalorder %s187, %s189
      %p193 = scmp.eq.s32.totalorder %s22, 0
      %p194 = por %p192, %p193
      %p195 = scmp.ne.s32.totalorder %s187, %s189
      %p196 = scmp.eq.s32.totalorder %s27, 1
      %p197 = por %p195, %p196
      %p198 = scmp.ne.s32.totalorder %s189, %s190
      %p199 = scmp.eq.s32.totalorder %s27, 0
      %p200 = por %p198, %p199
      %p201 = scmp.ne.s32.totalorder %s189, %s190
      %p202 = scmp.eq.s32.totalorder %s28, 1
      %p203 = por %p201, %p202
      %p205 = scmp.ne.s32.totalorder %s190, %s204
      %p206 = scmp.eq.s32.totalorder %s28, 0
      %p207 = por %p205, %p206
      %s209 = sadd.s32 %s208, 1
      %p212 = scmp.eq.s32.totalorder %s22, 1
      %p213 = scmp.ne.s32.totalorder %s208, %s210
      %p214 = scmp.eq.s32.totalorder %s22, 0
      %p215 = por %p213, %p214
      %p216 = scmp.ne.s32.totalorder %s208, %s210
      %p217 = scmp.eq.s32.totalorder %s27, 1
      %p218 = por %p216, %p217
      %p219 = scmp.ne.s32.totalorder %s210, %s211
      %p220 = scmp.eq.s32.totalorder %s27, 0
      %p221 = por %p219, %p220
      %p222 = scmp.ne.s32.totalorder %s210, %s211
      %p223 = scmp.eq.s32.totalorder %s28, 1
      %p224 = por %p222, %p223
      %p226 = scmp.ne.s32.totalorder %s211, %s225
      %p227 = scmp.eq.s32.totalorder %s28, 0
      %p228 = por %p226, %p227
      %s230 = sadd.s32 %s229, 1
      %p233 = scmp.eq.s32.totalorder %s22, 1
      %p234 = scmp.ne.s32.totalorder %s229, %s231
      %p235 = scmp.eq.s32.totalorder %s22, 0
      %p236 = por %p234, %p235
      %p237 = scmp.ne.s32.totalorder %s229, %s231
      %p238 = scmp.eq.s32.totalorder %s27, 1
      %p239 = por %p237, %p238
      %p240 = scmp.ne.s32.totalorder %s231, %s232
      %p241 = scmp.eq.s32.totalorder %s27, 0
      %p242 = por %p240, %p241
      %p243 = scmp.ne.s32.totalorder %s231, %s232
      %p244 = scmp.eq.s32.totalorder %s28, 1
      %p245 = por %p243, %p244
      %p247 = scmp.ne.s32.totalorder %s232, %s246
      %p248 = scmp.eq.s32.totalorder %s28, 0
      %p249 = por %p247, %p248
      %s251 = sadd.s32 %s250, 1
      %p254 = scmp.eq.s32.totalorder %s22, 1
      %p255 = scmp.ne.s32.totalorder %s250, %s252
      %p256 = scmp.eq.s32.totalorder %s22, 0
      %p257 = por %p255, %p256
      %p258 = scmp.ne.s32.totalorder %s250, %s252
      %p259 = scmp.eq.s32.totalorder %s27, 1
      %p260 = por %p258, %p259
      %p261 = scmp.ne.s32.totalorder %s252, %s253
      %p262 = scmp.eq.s32.totalorder %s27, 0
      %p263 = por %p261, %p262
      %p264 = scmp.ne.s32.totalorder %s252, %s253
      %p265 = scmp.eq.s32.totalorder %s28, 1
      %p266 = por %p264, %p265
      %p268 = scmp.ne.s32.totalorder %s253, %s267
      %p269 = scmp.eq.s32.totalorder %s28, 0
      %p270 = por %p268, %p269
      %s272 = sadd.s32 %s271, 1
      %p275 = scmp.eq.s32.totalorder %s22, 1
      %p276 = scmp.ne.s32.totalorder %s271, %s273
      %p277 = scmp.eq.s32.totalorder %s22, 0
      %p278 = por %p276, %p277
      %p279 = scmp.ne.s32.totalorder %s271, %s273
      %p280 = scmp.eq.s32.totalorder %s27, 1
      %p281 = por %p279, %p280
      %p282 = scmp.ne.s32.totalorder %s273, %s274
      %p283 = scmp.eq.s32.totalorder %s27, 0
      %p284 = por %p282, %p283
      %p285 = scmp.ne.s32.totalorder %s273, %s274
      %p286 = scmp.eq.s32.totalorder %s28, 1
      %p287 = por %p285, %p286
      %p289 = scmp.ne.s32.totalorder %s274, %s288
      %p290 = scmp.eq.s32.totalorder %s28, 0
      %p291 = por %p289, %p290
      %s293 = sadd.s32 %s292, 1
      %p296 = scmp.eq.s32.totalorder %s22, 1
      %p297 = scmp.ne.s32.totalorder %s292, %s294
      %p298 = scmp.eq.s32.totalorder %s22, 0
      %p299 = por %p297, %p298
      %p300 = scmp.ne.s32.totalorder %s292, %s294
      %p301 = scmp.eq.s32.totalorder %s27, 1
      %p302 = por %p300, %p301
      %p303 = scmp.ne.s32.totalorder %s294, %s295
      %p304 = scmp.eq.s32.totalorder %s27, 0
      %p305 = por %p303, %p304
      %p306 = scmp.ne.s32.totalorder %s294, %s295
      %p307 = scmp.eq.s32.totalorder %s28, 1
      %p308 = por %p306, %p307
      %p310 = scmp.ne.s32.totalorder %s295, %s309
      %p311 = scmp.eq.s32.totalorder %s28, 0
      %p312 = por %p310, %p311
      %s314 = sadd.s32 %s313, 1
      %p317 = scmp.eq.s32.totalorder %s22, 1
      %p318 = scmp.ne.s32.totalorder %s313, %s315
      %p319 = scmp.eq.s32.totalorder %s22, 0
      %p320 = por %p318, %p319
      %p321 = scmp.ne.s32.totalorder %s313, %s315
      %p322 = scmp.eq.s32.totalorder %s27, 1
      %p323 = por %p321, %p322
      %p324 = scmp.ne.s32.totalorder %s315, %s316
      %p325 = scmp.eq.s32.totalorder %s27, 0
      %p326 = por %p324, %p325
      %p327 = scmp.ne.s32.totalorder %s315, %s316
      %p328 = scmp.eq.s32.totalorder %s28, 1
      %p329 = por %p327, %p328
      %p331 = scmp.ne.s32.totalorder %s316, %s330
      %p332 = scmp.eq.s32.totalorder %s28, 0
      %p333 = por %p331, %p332
      %s334 = ssub.s32 %s22, %s29
      %p335 = scmp.eq.s32.totalorder %s334, 0
      %s337 = sadd.s32 %s336, 1
      %s338 = scalar_select %p335, %s336, %s337
      %p341 = pneg %p335
      %p342 = scmp.eq.s32.totalorder %s22, 1
      %p343 = por %p341, %p342
      %p344 = scmp.ne.s32.totalorder %s336, %s339
      %p345 = scmp.eq.s32.totalorder %s22, 0
      %p346 = por %p344, %p345
      %p347 = scmp.ne.s32.totalorder %s336, %s339
      %p348 = scmp.eq.s32.totalorder %s27, 1
      %p349 = por %p347, %p348
      %p350 = scmp.ne.s32.totalorder %s339, %s340
      %p351 = scmp.eq.s32.totalorder %s27, 0
      %p352 = por %p350, %p351
      %p353 = scmp.ne.s32.totalorder %s339, %s340
      %p354 = scmp.eq.s32.totalorder %s28, 1
      %p355 = por %p353, %p354
      %p357 = scmp.ne.s32.totalorder %s340, %s356
      %p358 = scmp.eq.s32.totalorder %s28, 0
      %p359 = por %p357, %p358
      %s360 = ssub.s32 %s22, %s29
      %p361 = scmp.eq.s32.totalorder %s360, 0
      %s363 = sadd.s32 %s362, 1
      %s364 = scalar_select %p361, %s362, %s363
      %p367 = pneg %p361
      %p368 = scmp.eq.s32.totalorder %s22, 1
      %p369 = por %p367, %p368
      %p370 = scmp.ne.s32.totalorder %s362, %s365
      %p371 = scmp.eq.s32.totalorder %s22, 0
      %p372 = por %p370, %p371
      %p373 = scmp.ne.s32.totalorder %s362, %s365
      %p374 = scmp.eq.s32.totalorder %s27, 1
      %p375 = por %p373, %p374
      %p376 = scmp.ne.s32.totalorder %s365, %s366
      %p377 = scmp.eq.s32.totalorder %s27, 0
      %p378 = por %p376, %p377
      %p379 = scmp.ne.s32.totalorder %s365, %s366
      %p380 = scmp.eq.s32.totalorder %s28, 1
      %p381 = por %p379, %p380
      %p383 = scmp.ne.s32.totalorder %s366, %s382
      %p384 = scmp.eq.s32.totalorder %s28, 0
      %p385 = por %p383, %p384
      %p386 = scmp.le.s32.totalorder 1, %s22
      %p387 = scmp.lt.s32.totalorder %s22, 3
      %p388 = pnand %p386, %p387
      %p389 = pneg %p388
      // Predicated region
      $region9: #{tpu_custom_call.1} parent=5 // pred_check
        _
      $region10: #{tpu_custom_call.1} parent=5 // pred_check_branch
        %391 = sbr.rel (%p388) target = $region12
      $region11: #{tpu_custom_call.1} parent=5 // pred_region
        %s392 = ssub.s32 %s22, 1
        // Predicated region
        $region13: #{tpu_custom_call.1} parent=11 // pred_check
          %p393 = pneg %p95
        $region14: #{tpu_custom_call.1} parent=11 // pred_check_branch
          %395 = sbr.rel (%p393) target = $region16
        $region15: #{tpu_custom_call.1} parent=11 // pred_region
          _
        $region16: #{tpu_custom_call.1} parent=11 // pred_fallthru
          _
        // Predicated region
        $region17: #{tpu_custom_call.1} parent=11 // pred_check
          %p396 = pneg %p116
        $region18: #{tpu_custom_call.1} parent=11 // pred_check_branch
          %398 = sbr.rel (%p396) target = $region20
        $region19: #{tpu_custom_call.1} parent=11 // pred_region
          _
        $region20: #{tpu_custom_call.1} parent=11 // pred_fallthru
          _
        // Predicated region
        $region21: #{tpu_custom_call.1} parent=11 // pred_check
          %p399 = pneg %p137
        $region22: #{tpu_custom_call.1} parent=11 // pred_check_branch
          %401 = sbr.rel (%p399) target = $region24
        $region23: #{tpu_custom_call.1} parent=11 // pred_region
          _
        $region24: #{tpu_custom_call.1} parent=11 // pred_fallthru
          _
        // Predicated region
        $region25: #{tpu_custom_call.1} parent=11 // pred_check
          %p402 = pneg %p158
        $region26: #{tpu_custom_call.1} parent=11 // pred_check_branch
          %404 = sbr.rel (%p402) target = $region28
        $region27: #{tpu_custom_call.1} parent=11 // pred_region
          _
        $region28: #{tpu_custom_call.1} parent=11 // pred_fallthru
          _
        // Predicated region
        $region29: #{tpu_custom_call.1} parent=11 // pred_check
          %p405 = pneg %p179
        $region30: #{tpu_custom_call.1} parent=11 // pred_check_branch
          %407 = sbr.rel (%p405) target = $region32
        $region31: #{tpu_custom_call.1} parent=11 // pred_region
          _
        $region32: #{tpu_custom_call.1} parent=11 // pred_fallthru
          _
        // Predicated region
        $region33: #{tpu_custom_call.1} parent=11 // pred_check
          %p408 = pneg %p200
        $region34: #{tpu_custom_call.1} parent=11 // pred_check_branch
          %410 = sbr.rel (%p408) target = $region36
        $region35: #{tpu_custom_call.1} parent=11 // pred_region
          _
        $region36: #{tpu_custom_call.1} parent=11 // pred_fallthru
          _
        // Predicated region
        $region37: #{tpu_custom_call.1} parent=11 // pred_check
          %p411 = pneg %p221
        $region38: #{tpu_custom_call.1} parent=11 // pred_check_branch
          %413 = sbr.rel (%p411) target = $region40
        $region39: #{tpu_custom_call.1} parent=11 // pred_region
          _
        $region40: #{tpu_custom_call.1} parent=11 // pred_fallthru
          _
        // Predicated region
        $region41: #{tpu_custom_call.1} parent=11 // pred_check
          %p414 = pneg %p242
        $region42: #{tpu_custom_call.1} parent=11 // pred_check_branch
          %416 = sbr.rel (%p414) target = $region44
        $region43: #{tpu_custom_call.1} parent=11 // pred_region
          _
        $region44: #{tpu_custom_call.1} parent=11 // pred_fallthru
          _
        // Predicated region
        $region45: #{tpu_custom_call.1} parent=11 // pred_check
          %p417 = pneg %p263
        $region46: #{tpu_custom_call.1} parent=11 // pred_check_branch
          %419 = sbr.rel (%p417) target = $region48
        $region47: #{tpu_custom_call.1} parent=11 // pred_region
          _
        $region48: #{tpu_custom_call.1} parent=11 // pred_fallthru
          _
        // Predicated region
        $region49: #{tpu_custom_call.1} parent=11 // pred_check
          %p420 = pneg %p284
        $region50: #{tpu_custom_call.1} parent=11 // pred_check_branch
          %422 = sbr.rel (%p420) target = $region52
        $region51: #{tpu_custom_call.1} parent=11 // pred_region
          _
        $region52: #{tpu_custom_call.1} parent=11 // pred_fallthru
          _
        // Predicated region
        $region53: #{tpu_custom_call.1} parent=11 // pred_check
          %p423 = pneg %p305
        $region54: #{tpu_custom_call.1} parent=11 // pred_check_branch
          %425 = sbr.rel (%p423) target = $region56
        $region55: #{tpu_custom_call.1} parent=11 // pred_region
          _
        $region56: #{tpu_custom_call.1} parent=11 // pred_fallthru
          _
        // Predicated region
        $region57: #{tpu_custom_call.1} parent=11 // pred_check
          %p426 = pneg %p326
        $region58: #{tpu_custom_call.1} parent=11 // pred_check_branch
          %428 = sbr.rel (%p426) target = $region60
        $region59: #{tpu_custom_call.1} parent=11 // pred_region
          _
        $region60: #{tpu_custom_call.1} parent=11 // pred_fallthru
          _
      $region12: #{tpu_custom_call.1} parent=5 // pred_fallthru
        _
      %p429 = scmp.lt.s32.totalorder %s22, 2
      // Predicated region
      $region61: #{tpu_custom_call.1} parent=5 // pred_check
        %p430 = pneg %p429
      $region62: #{tpu_custom_call.1} parent=5 // pred_check_branch
        %432 = sbr.rel (%p430) target = $region64
      $region63: #{tpu_custom_call.1} parent=5 // pred_region
        // Predicated region
        $region65: #{tpu_custom_call.1} parent=63 // pred_check
          %p433 = pneg %p42
        $region66: #{tpu_custom_call.1} parent=63 // pred_check_branch
          %435 = sbr.rel (%p433) target = $region68
        $region67: #{tpu_custom_call.1} parent=63 // pred_region
          %s436 = smul.u32 3, %s22
          %p437 = scmp.lt.s32.totalorder %s436, 5
          %s438 = scalar_select %p437, %s436, 5
          %s439 = smul.addr %s438, 8
          %s440 = scalar_lea.vmem %s0, %s439
          %s441 = smul.u32 3, %s22
        $region68: #{tpu_custom_call.1} parent=63 // pred_fallthru
          _
        // Predicated region
        $region69: #{tpu_custom_call.1} parent=63 // pred_check
          %p442 = pneg %p68
        $region70: #{tpu_custom_call.1} parent=63 // pred_check_branch
          %444 = sbr.rel (%p442) target = $region72
        $region71: #{tpu_custom_call.1} parent=63 // pred_region
          %s445 = sand.u32 %s58, 1
          %s446 = sand.u32 %s58, 1
          %s447 = smul.addr %s446, 72
          %s448 = scalar_lea.vmem [#allocation2], %s447
          %s449 = smul.u32 3, %s22
          %s450 = smul.addr %s449, 8
          %s451 = scalar_lea.vmem %s1, %s450
          // Predicated region
          $region73: #{tpu_custom_call.1} parent=71 // pred_check
            _
          $region74: #{tpu_custom_call.1} parent=71 // pred_check_branch
            %453 = sbr.rel (0) target = $region76
          $region75: #{tpu_custom_call.1} parent=71 // pred_region
            // Predicated region
            $region77: #{tpu_custom_call.1} parent=75 // pred_check
              _
            $region78: #{tpu_custom_call.1} parent=75 // pred_check_branch
              %455 = sbr.rel (0) target = $region80
            $region79: #{tpu_custom_call.1} parent=75 // pred_region
              // Predicated region
              $region92: #{tpu_custom_call.1} parent=79 // pred_check
                _
              $region93: #{tpu_custom_call.1} parent=79 // pred_check_branch
                %487 = sbr.rel (0) target = $region95
              $region94: #{tpu_custom_call.1} parent=79 // pred_region
                loop: start=0, step=1, limit=1
                $region96: #{tpu_custom_call.1} parent=94 // loop_pre_header
                  _
                $region97: #{tpu_custom_call.1} parent=94 // loop_header
                  %s489 = sphi 0, %s493
                  %p490 = scmp.ge.s32.totalorder %s489, 1
                  %s494 = sphi %s451, %s451
                  %s495 = sphi %s448, %s448
                $region98: #{tpu_custom_call.1} parent=94 // loop_header_branch
                  %492 = sbr.rel (%p490) target = $region102
                $region99: #{tpu_custom_call.1} parent=94 // loop_body
                  %v496 = vld [vmem:[%s494] sm:$0xff]
                  %497 = vst [vmem:[%s495] sm:$0xff] %v496
                  %v498 = vld [vmem:[%s494 + $0x8] sm:$0xff]
                  %499 = vst [vmem:[%s495 + $0x8] sm:$0xff] %v498
                  %v500 = vld [vmem:[%s494 + $0x10] sm:$0xff]
                  %501 = vst [vmem:[%s495 + $0x10] sm:$0xff] %v500
                  %v502 = vld [vmem:[%s494 + $0x30] sm:$0xff]
                  %503 = vst [vmem:[%s495 + $0x18] sm:$0xff] %v502
                  %v504 = vld [vmem:[%s494 + $0x38] sm:$0xff]
                  %505 = vst [vmem:[%s495 + $0x20] sm:$0xff] %v504
                  %v506 = vld [vmem:[%s494 + $0x40] sm:$0xff]
                  %507 = vst [vmem:[%s495 + $0x28] sm:$0xff] %v506
                  %v508 = vld [vmem:[%s494 + $0x60] sm:$0xff]
                  %509 = vst [vmem:[%s495 + $0x30] sm:$0xff] %v508
                  %v510 = vld [vmem:[%s494 + $0x68] sm:$0xff]
                  %511 = vst [vmem:[%s495 + $0x38] sm:$0xff] %v510
                  %v512 = vld [vmem:[%s494 + $0x70] sm:$0xff]
                  %513 = vst [vmem:[%s495 + $0x40] sm:$0xff] %v512
                $region100: #{tpu_custom_call.1} parent=94 // loop_footer
                  %s493 = sadd.s32 1, %s489
                $region101: #{tpu_custom_call.1} parent=94 // loop_footer_branch
                  %488 = sbr.rel target = $region97
                $region102: #{tpu_custom_call.1} parent=94 // loop_exit
                  _
              $region95: #{tpu_custom_call.1} parent=79 // pred_fallthru
                _
              // Predicated region
              $region103: #{tpu_custom_call.1} parent=79 // pred_check
                _
              $region104: #{tpu_custom_call.1} parent=79 // pred_check_branch
                %515 = sbr.rel target = $region106
              $region105: #{tpu_custom_call.1} parent=79 // pred_region
                _
              $region106: #{tpu_custom_call.1} parent=79 // pred_fallthru
                _
            $region80: #{tpu_custom_call.1} parent=75 // pred_fallthru
              _
            // Predicated region
            $region81: #{tpu_custom_call.1} parent=75 // pred_check
              _
            $region82: #{tpu_custom_call.1} parent=75 // pred_check_branch
              %457 = sbr.rel target = $region84
            $region83: #{tpu_custom_call.1} parent=75 // pred_region
              %s459 = ssub.s32 256, 1
              loop: start=0, step=1, limit=1
              $region85: #{tpu_custom_call.1} parent=83 // loop_pre_header
                _
              $region86: #{tpu_custom_call.1} parent=83 // loop_header
                %s461 = sphi 0, %s465
                %p462 = scmp.ge.s32.totalorder %s461, 1
                %s466 = sphi %s451, %s451
                %s467 = sphi %s448, %s448
              $region87: #{tpu_custom_call.1} parent=83 // loop_header_branch
                %464 = sbr.rel (%p462) target = $region91
              $region88: #{tpu_custom_call.1} parent=83 // loop_body
                %v468 = vld [vmem:[%s466] sm:%s459]
                %469 = vst [vmem:[%s467] sm:%s459] %v468
                %v470 = vld [vmem:[%s466 + $0x8] sm:%s459]
                %471 = vst [vmem:[%s467 + $0x8] sm:%s459] %v470
                %v472 = vld [vmem:[%s466 + $0x10] sm:%s459]
                %473 = vst [vmem:[%s467 + $0x10] sm:%s459] %v472
                %v474 = vld [vmem:[%s466 + $0x30] sm:%s459]
                %475 = vst [vmem:[%s467 + $0x18] sm:%s459] %v474
                %v476 = vld [vmem:[%s466 + $0x38] sm:%s459]
                %477 = vst [vmem:[%s467 + $0x20] sm:%s459] %v476
                %v478 = vld [vmem:[%s466 + $0x40] sm:%s459]
                %479 = vst [vmem:[%s467 + $0x28] sm:%s459] %v478
                %v480 = vld [vmem:[%s466 + $0x60] sm:%s459]
                %481 = vst [vmem:[%s467 + $0x30] sm:%s459] %v480
                %v482 = vld [vmem:[%s466 + $0x68] sm:%s459]
                %483 = vst [vmem:[%s467 + $0x38] sm:%s459] %v482
                %v484 = vld [vmem:[%s466 + $0x70] sm:%s459]
                %485 = vst [vmem:[%s467 + $0x40] sm:%s459] %v484
              $region89: #{tpu_custom_call.1} parent=83 // loop_footer
                %s465 = sadd.s32 1, %s461
              $region90: #{tpu_custom_call.1} parent=83 // loop_footer_branch
                %460 = sbr.rel target = $region86
              $region91: #{tpu_custom_call.1} parent=83 // loop_exit
                _
            $region84: #{tpu_custom_call.1} parent=75 // pred_fallthru
              _
          $region76: #{tpu_custom_call.1} parent=71 // pred_fallthru
            _
          %516 = vnop
        $region72: #{tpu_custom_call.1} parent=63 // pred_fallthru
          _
      $region64: #{tpu_custom_call.1} parent=5 // pred_fallthru
        _
      %p517 = scmp.le.s32.totalorder 1, %s22
      %p518 = scmp.lt.s32.totalorder %s22, 3
      %p519 = pnand %p517, %p518
      %p520 = pneg %p519
      // Predicated region
      $region107: #{tpu_custom_call.1} parent=5 // pred_check
        _
      $region108: #{tpu_custom_call.1} parent=5 // pred_check_branch
        %522 = sbr.rel (%p519) target = $region110
      $region109: #{tpu_custom_call.1} parent=5 // pred_region
        %s523 = ssub.s32 %s22, 1
        %s524 = sand.u32 %s61, 1
        %s525 = sand.u32 %s61, 1
        %s526 = smul.addr %s525, 72
        %s527 = scalar_lea.vmem [#allocation2], %s526
        // Predicated region
        $region111: #{tpu_custom_call.1} parent=109 // pred_check
          %p528 = pneg %p74
        $region112: #{tpu_custom_call.1} parent=109 // pred_check_branch
          %530 = sbr.rel (%p528) target = $region114
        $region113: #{tpu_custom_call.1} parent=109 // pred_region
          _
        $region114: #{tpu_custom_call.1} parent=109 // pred_fallthru
          _
        %s531 = smul.u32 3, %s27
        %p532 = scmp.lt.s32.totalorder %s531, 5
        %s533 = scalar_select %p532, %s531, 5
        %s534 = smul.addr %s533, 8
        %s535 = scalar_lea.vmem %s0, %s534
        %p536 = pneg %p48
        %p537 = pneg %p45
        %s538 = sand.u32 %s61, 1
        %s539 = sand.u32 %s61, 1
        %s540 = smul.addr %s539, 72
        %s541 = scalar_lea.vmem [#allocation2], %s540
        %p542 = pneg %p74
        %p543 = pneg %p71
        %p544 = pneg %p95
        %p545 = pneg %p92
        %p546 = pneg %p116
        %p547 = pneg %p113
        %p548 = pneg %p137
        %p549 = pneg %p134
        %p550 = pneg %p158
        %p551 = pneg %p155
        %p552 = pneg %p179
        %p553 = pneg %p176
        %p554 = pneg %p200
        %p555 = pneg %p197
        %p556 = pneg %p221
        %p557 = pneg %p218
        %p558 = pneg %p242
        %p559 = pneg %p239
        %p560 = pneg %p263
        %p561 = pneg %p260
        %p562 = pneg %p284
        %p563 = pneg %p281
        %p564 = pneg %p305
        %p565 = pneg %p302
        %p566 = pneg %p326
        %p567 = pneg %p323
        %p568 = pneg %p352
        %p569 = pneg %p349
        %s570 = smul.u32 3, %s27
        %p571 = scmp.lt.s32.totalorder %s570, 5
        %s572 = scalar_select %p571, %s570, 5
        %s573 = smul.addr %s572, 8
        %s574 = scalar_lea.vmem %s14, %s573
        %p575 = pneg %p378
        %p576 = pneg %p375
        %s577 = smul.u32 3, %s27
        %p578 = scmp.lt.s32.totalorder %s577, 5
        %s579 = scalar_select %p578, %s577, 5
        %s580 = smul.addr %s579, 8
        %s581 = scalar_lea.vmem %s15, %s580
        %s582 = smul.u32 3, %s27
        %p583 = scmp.lt.s32.totalorder %s582, 5
        %s584 = scalar_select %p583, %s582, 5
        %s585 = smul.addr %s584, 8
        %s586 = scalar_lea.vmem %s0, %s585
        %s587 = smul.u32 3, %s27
        %s588 = smul.u32 3, %s27
        %s589 = smul.u32 3, %s27
        %p590 = scmp.lt.s32.totalorder %s589, 5
        %s591 = scalar_select %p590, %s589, 5
        %s592 = smul.addr %s591, 8
        %s593 = scalar_lea.vmem %s14, %s592
        %s594 = smul.u32 3, %s27
        %s595 = smul.u32 3, %s27
        %p596 = scmp.lt.s32.totalorder %s595, 5
        %s597 = scalar_select %p596, %s595, 5
        %s598 = smul.addr %s597, 8
        %s599 = scalar_lea.vmem %s15, %s598
        %s600 = smul.u32 3, %s27
        %v601 = vld [vmem:[%s586] sm:$0xff]
        %v602 = vld [vmem:[%s586 + $0x8] sm:$0xff]
        %v603 = vld [vmem:[%s586 + $0x10] sm:$0xff]
        %v604 = vld [vmem:[%s527] sm:$0xff]
        %v605 = vld [vmem:[%s527 + $0x8] sm:$0xff]
        %v606 = vld [vmem:[%s527 + $0x10] sm:$0xff]
        %s607 = scalar_lea.vmem %s527, 24 [#allocation2]
        %v608 = vld [vmem:[%s607] sm:$0xff]
        %v609 = vld [vmem:[%s607 + $0x8] sm:$0xff]
        %v610 = vld [vmem:[%s607 + $0x10] sm:$0xff]
        %s611 = scalar_lea.vmem %s527, 48 [#allocation2]
        %v612 = vld [vmem:[%s611] sm:$0xff]
        %v613 = vld [vmem:[%s611 + $0x8] sm:$0xff]
        %v614 = vld [vmem:[%s611 + $0x10] sm:$0xff]
        %v615 = vld [vmem:[%s2] sm:$0xff]
        %v616 = vld [vmem:[%s2 + $0x8] sm:$0xff]
        %v617 = vld [vmem:[%s2 + $0x10] sm:$0xff]
        %v618 = vld [vmem:[%s2 + $0x18] sm:$0xff]
        %vm619 = vcmask 261120
        %v621 = vsel %vm619, %v604, 0
        %v624 = vsel %vm619, %v605, 0
        %v627 = vsel %vm619, %v606, 0
        %v630 = vsel %vm619, %v608, 0
        %v633 = vsel %vm619, %v609, 0
        %v636 = vsel %vm619, %v610, 0
        %v639 = vsel %vm619, %v612, 0
        %v642 = vsel %vm619, %v613, 0
        %v645 = vsel %vm619, %v614, 0
        %647 = vmatprep.subr.mxu0 0.0
        %648 = vmatpush1.msra.mxu0 0.0
        %649 = vmatprep.subr.mxu0 0.0
        %650 = vmatpush1.msra.mxu0 0.0
        %651 = vmatprep.subr.mxu0 0.0
        %652 = vmatpush1.msra.mxu0 0.0
        %653 = vmatprep.subr.mxu0 0.0
        %654 = vmatpush1.msra.mxu0 0.0
        %655 = vmatprep.subr.mxu0 0.0
        %656 = vmatpush1.msra.mxu0 0.0
        %657 = vmatprep.subr.mxu0 0.0
        %658 = vmatpush1.msra.mxu0 0.0
        %659 = vmatprep.subr.mxu0 0.0
        %660 = vmatpush1.msra.mxu0 0.0
        %661 = vmatprep.subr.mxu0 0.0
        %662 = vmatpush1.msra.mxu0 0.0
        %663 = vmatprep.subr.mxu0 0.0
        %664 = vmatpush1.msra.mxu0 0.0
        %665 = vmatprep.subr.mxu0 0.0
        %666 = vmatpush1.msra.mxu0 0.0
        %667 = vmatprep.subr.mxu0 0.0
        %668 = vmatpush1.msra.mxu0 0.0
        %669 = vmatprep.subr.mxu0 0.0
        %670 = vmatpush1.msra.mxu0 0.0
        %671 = vmatprep.subr.mxu0 0.0
        %672 = vmatpush1.msra.mxu0 %v618
        %673 = vmatprep.subr.mxu0 0.0
        %674 = vmatpush1.msra.mxu0 %v617
        %675 = vmatprep.subr.mxu0 0.0
        %676 = vmatpush1.msra.mxu0 %v616
        %677 = vmatprep.subr.mxu0 0.0
        %678 = vmatpush1.msra.mxu0 %v615
        %679 = vmatprep.subr.mxu0 0.0
        %680 = vmatpush2.msra.mxu0 0.0
        %681 = vmatprep.subr.mxu0 0.0
        %682 = vmatpush2.msra.mxu0 0.0
        %683 = vmatprep.subr.mxu0 0.0
        %684 = vmatpush2.msra.mxu0 0.0
        %685 = vmatprep.subr.mxu0 0.0
        %686 = vmatpush2.msra.mxu0 0.0
        %687 = vmatprep.subr.mxu0 0.0
        %688 = vmatpush2.msra.mxu0 0.0
        %689 = vmatprep.subr.mxu0 0.0
        %690 = vmatpush2.msra.mxu0 0.0
        %691 = vmatprep.subr.mxu0 0.0
        %692 = vmatpush2.msra.mxu0 0.0
        %693 = vmatprep.subr.mxu0 0.0
        %694 = vmatpush2.msra.mxu0 0.0
        %695 = vmatprep.subr.mxu0 0.0
        %696 = vmatpush2.msra.mxu0 0.0
        %697 = vmatprep.subr.mxu0 0.0
        %698 = vmatpush2.msra.mxu0 0.0
        %699 = vmatprep.subr.mxu0 0.0
        %700 = vmatpush2.msra.mxu0 0.0
        %701 = vmatprep.subr.mxu0 0.0
        %702 = vmatpush2.msra.mxu0 0.0
        %703 = vmatprep.subr.mxu0 0.0
        %704 = vmatpush2.msra.mxu0 0.0
        %705 = vmatprep.subr.mxu0 0.0
        %706 = vmatpush2.msra.mxu0 0.0
        %707 = vmatprep.subr.mxu0 0.0
        %708 = vmatpush2.msra.mxu0 0.0
        %709 = vmatprep.subr.mxu0 0.0
        %710 = vmatpush2.msra.mxu0 0.0
        %711 = vmatprep.mubr.f32.mxu0 0.0
        %712 = vmatmul.mubr.f32.gmra.mxu0 %v621
        %v713 = vpop.f32.mrf.mxu0
        %v714 = vadd.f32 0.0, %v713
        %v715 = vpop.f32.mrf.mxu0
        %716 = vmatprep.mubr.f32.mxu0 0.0
        %717 = vmatmul.mubr.f32.gmra.mxu0 %v624
        %v718 = vpop.f32.mrf.mxu0
        %v719 = vadd.f32 0.0, %v718
        %v720 = vpop.f32.mrf.mxu0
        %721 = vmatprep.mubr.f32.mxu0 0.0
        %722 = vmatmul.mubr.f32.gmra.mxu0 %v627
        %v723 = vpop.f32.mrf.mxu0
        %v724 = vadd.f32 0.0, %v723
        %v725 = vpop.f32.mrf.mxu0
        %726 = vmatprep.mubr.f32.mxu0 0.0
        %727 = vmatmul.mubr.f32.gmra.mxu0 %v630
        %v728 = vpop.f32.mrf.mxu0
        %v729 = vadd.f32 0.0, %v728
        %v730 = vpop.f32.mrf.mxu0
        %731 = vmatprep.mubr.f32.mxu0 0.0
        %732 = vmatmul.mubr.f32.gmra.mxu0 %v633
        %v733 = vpop.f32.mrf.mxu0
        %v734 = vadd.f32 0.0, %v733
        %v735 = vpop.f32.mrf.mxu0
        %736 = vmatprep.mubr.f32.mxu0 0.0
        %737 = vmatmul.mubr.f32.gmra.mxu0 %v636
        %v738 = vpop.f32.mrf.mxu0
        %v739 = vadd.f32 0.0, %v738
        %v740 = vpop.f32.mrf.mxu0
        %741 = vmatprep.mubr.f32.mxu0 0.0
        %742 = vmatmul.mubr.f32.gmra.mxu0 %v639
        %v743 = vpop.f32.mrf.mxu0
        %v744 = vadd.f32 0.0, %v743
        %v745 = vpop.f32.mrf.mxu0
        %746 = vmatprep.mubr.f32.mxu0 0.0
        %747 = vmatmul.mubr.f32.gmra.mxu0 %v642
        %v748 = vpop.f32.mrf.mxu0
        %v749 = vadd.f32 0.0, %v748
        %v750 = vpop.f32.mrf.mxu0
        %751 = vmatprep.mubr.f32.mxu0 0.0
        %752 = vmatmul.mubr.f32.gmra.mxu0 %v645
        %v753 = vpop.f32.mrf.mxu0
        %v754 = vadd.f32 0.0, %v753
        %v755 = vpop.f32.mrf.mxu0
        %756 = vdwg.mxu0
        %v757 = vmul.f32 %v714, %v714
        %v758 = vmul.f32 %v719, %v719
        %v759 = vmul.f32 %v724, %v724
        %v760 = vmul.f32 %v729, %v729
        %v761 = vmul.f32 %v734, %v734
        %v762 = vmul.f32 %v739, %v739
        %v763 = vadd.f32 %v757, %v760
        %v764 = vadd.f32 %v758, %v761
        %v765 = vadd.f32 %v759, %v762
        %v766 = vmul.f32 %v744, %v744
        %v767 = vmul.f32 %v749, %v749
        %v768 = vmul.f32 %v754, %v754
        %v769 = vadd.f32 %v763, %v766
        %v770 = vadd.f32 %v764, %v767
        %v771 = vadd.f32 %v765, %v768
        %v772 = vrsqrt.pop %v769
        %v773 = vmul.f32 %v769, %v772
        %vm774 = vcmp.eq.f32.partialorder %v769, inf
        %v775 = vsel %vm774, %v769, %v773
        %vm776 = vcmp.eq.f32.partialorder %v769, 0.0
        %v777 = vand.u32 %v769, 2147483648
        %v778 = vsel %vm776, %v777, %v775
        %v779 = vrsqrt.pop %v770
        %v780 = vmul.f32 %v770, %v779
        %vm781 = vcmp.eq.f32.partialorder %v770, inf
        %v782 = vsel %vm781, %v770, %v780
        %vm783 = vcmp.eq.f32.partialorder %v770, 0.0
        %v784 = vand.u32 %v770, 2147483648
        %v785 = vsel %vm783, %v784, %v782
        %v786 = vrsqrt.pop %v771
        %v787 = vmul.f32 %v771, %v786
        %vm788 = vcmp.eq.f32.partialorder %v771, inf
        %v789 = vsel %vm788, %v771, %v787
        %vm790 = vcmp.eq.f32.partialorder %v771, 0.0
        %v791 = vand.u32 %v771, 2147483648
        %v792 = vsel %vm790, %v791, %v789
        %v793 = vld [vmem:[%s3] sm:$0xff]
        %v794 = vld [vmem:[%s3 + $0x8] sm:$0xff]
        %v795 = vld [vmem:[%s3 + $0x10] sm:$0xff]
        %v796 = vld [vmem:[%s3 + $0x18] sm:$0xff]
        %v797 = vld [vmem:[%s4] sm:$0xff]
        %v798 = vld [vmem:[%s4 + $0x8] sm:$0xff]
        %v799 = vld [vmem:[%s4 + $0x10] sm:$0xff]
        %v800 = vld [vmem:[%s4 + $0x18] sm:$0xff]
        %v802 = vsel %vm619, %v778, 0
        %v805 = vsel %vm619, %v785, 0
        %v808 = vsel %vm619, %v792, 0
        %810 = vmatprep.subr.mxu0 0.0
        %811 = vmatpush1.msra.mxu0 0.0
        %812 = vmatprep.subr.mxu0 0.0
        %813 = vmatpush1.msra.mxu0 0.0
        %814 = vmatprep.subr.mxu0 0.0
        %815 = vmatpush1.msra.mxu0 0.0
        %816 = vmatprep.subr.mxu0 0.0
        %817 = vmatpush1.msra.mxu0 0.0
        %818 = vmatprep.subr.mxu0 0.0
        %819 = vmatpush1.msra.mxu0 0.0
        %820 = vmatprep.subr.mxu0 0.0
        %821 = vmatpush1.msra.mxu0 0.0
        %822 = vmatprep.subr.mxu0 0.0
        %823 = vmatpush1.msra.mxu0 0.0
        %824 = vmatprep.subr.mxu0 0.0
        %825 = vmatpush1.msra.mxu0 0.0
        %826 = vmatprep.subr.mxu0 0.0
        %827 = vmatpush1.msra.mxu0 0.0
        %828 = vmatprep.subr.mxu0 0.0
        %829 = vmatpush1.msra.mxu0 0.0
        %830 = vmatprep.subr.mxu0 0.0
        %831 = vmatpush1.msra.mxu0 0.0
        %832 = vmatprep.subr.mxu0 0.0
        %833 = vmatpush1.msra.mxu0 0.0
        %834 = vmatprep.subr.mxu0 0.0
        %835 = vmatpush1.msra.mxu0 %v800
        %836 = vmatprep.subr.mxu0 0.0
        %837 = vmatpush1.msra.mxu0 %v799
        %838 = vmatprep.subr.mxu0 0.0
        %839 = vmatpush1.msra.mxu0 %v798
        %840 = vmatprep.subr.mxu0 0.0
        %841 = vmatpush1.msra.mxu0 %v797
        %842 = vmatprep.subr.mxu0 0.0
        %843 = vmatpush2.msra.mxu0 0.0
        %844 = vmatprep.subr.mxu0 0.0
        %845 = vmatpush2.msra.mxu0 0.0
        %846 = vmatprep.subr.mxu0 0.0
        %847 = vmatpush2.msra.mxu0 0.0
        %848 = vmatprep.subr.mxu0 0.0
        %849 = vmatpush2.msra.mxu0 0.0
        %850 = vmatprep.subr.mxu0 0.0
        %851 = vmatpush2.msra.mxu0 0.0
        %852 = vmatprep.subr.mxu0 0.0
        %853 = vmatpush2.msra.mxu0 0.0
        %854 = vmatprep.subr.mxu0 0.0
        %855 = vmatpush2.msra.mxu0 0.0
        %856 = vmatprep.subr.mxu0 0.0
        %857 = vmatpush2.msra.mxu0 0.0
        %858 = vmatprep.subr.mxu0 0.0
        %859 = vmatpush2.msra.mxu0 0.0
        %860 = vmatprep.subr.mxu0 0.0
        %861 = vmatpush2.msra.mxu0 0.0
        %862 = vmatprep.subr.mxu0 0.0
        %863 = vmatpush2.msra.mxu0 0.0
        %864 = vmatprep.subr.mxu0 0.0
        %865 = vmatpush2.msra.mxu0 0.0
        %866 = vmatprep.subr.mxu0 0.0
        %867 = vmatpush2.msra.mxu0 0.0
        %868 = vmatprep.subr.mxu0 0.0
        %869 = vmatpush2.msra.mxu0 0.0
        %870 = vmatprep.subr.mxu0 0.0
        %871 = vmatpush2.msra.mxu0 0.0
        %872 = vmatprep.subr.mxu0 0.0
        %873 = vmatpush2.msra.mxu0 0.0
        %874 = vmatprep.mubr.f32.mxu0 0.0
        %875 = vmatmul.mubr.f32.gmra.mxu0 %v802
        %v876 = vpop.f32.mrf.mxu0
        %v877 = vadd.f32 0.0, %v876
        %v878 = vpop.f32.mrf.mxu0
        %879 = vmatprep.mubr.f32.mxu0 0.0
        %880 = vmatmul.mubr.f32.gmra.mxu0 %v805
        %v881 = vpop.f32.mrf.mxu0
        %v882 = vadd.f32 0.0, %v881
        %v883 = vpop.f32.mrf.mxu0
        %884 = vmatprep.mubr.f32.mxu0 0.0
        %885 = vmatmul.mubr.f32.gmra.mxu0 %v808
        %v886 = vpop.f32.mrf.mxu0
        %v887 = vadd.f32 0.0, %v886
        %v888 = vpop.f32.mrf.mxu0
        %889 = vdwg.mxu0
        %v891 = vsel %vm619, %v601, 0
        %v894 = vsel %vm619, %v602, 0
        %v897 = vsel %vm619, %v603, 0
        %899 = vmatprep.subr.mxu0 0.0
        %900 = vmatpush1.msra.mxu0 0.0
        %901 = vmatprep.subr.mxu0 0.0
        %902 = vmatpush1.msra.mxu0 0.0
        %903 = vmatprep.subr.mxu0 0.0
        %904 = vmatpush1.msra.mxu0 0.0
        %905 = vmatprep.subr.mxu0 0.0
        %906 = vmatpush1.msra.mxu0 0.0
        %907 = vmatprep.subr.mxu0 0.0
        %908 = vmatpush1.msra.mxu0 0.0
        %909 = vmatprep.subr.mxu0 0.0
        %910 = vmatpush1.msra.mxu0 0.0
        %911 = vmatprep.subr.mxu0 0.0
        %912 = vmatpush1.msra.mxu0 0.0
        %913 = vmatprep.subr.mxu0 0.0
        %914 = vmatpush1.msra.mxu0 0.0
        %915 = vmatprep.subr.mxu0 0.0
        %916 = vmatpush1.msra.mxu0 0.0
        %917 = vmatprep.subr.mxu0 0.0
        %918 = vmatpush1.msra.mxu0 0.0
        %919 = vmatprep.subr.mxu0 0.0
        %920 = vmatpush1.msra.mxu0 0.0
        %921 = vmatprep.subr.mxu0 0.0
        %922 = vmatpush1.msra.mxu0 0.0
        %923 = vmatprep.subr.mxu0 0.0
        %924 = vmatpush1.msra.mxu0 %v796
        %925 = vmatprep.subr.mxu0 0.0
        %926 = vmatpush1.msra.mxu0 %v795
        %927 = vmatprep.subr.mxu0 0.0
        %928 = vmatpush1.msra.mxu0 %v794
        %929 = vmatprep.subr.mxu0 0.0
        %930 = vmatpush1.msra.mxu0 %v793
        %931 = vmatprep.subr.mxu0 0.0
        %932 = vmatpush2.msra.mxu0 0.0
        %933 = vmatprep.subr.mxu0 0.0
        %934 = vmatpush2.msra.mxu0 0.0
        %935 = vmatprep.subr.mxu0 0.0
        %936 = vmatpush2.msra.mxu0 0.0
        %937 = vmatprep.subr.mxu0 0.0
        %938 = vmatpush2.msra.mxu0 0.0
        %939 = vmatprep.subr.mxu0 0.0
        %940 = vmatpush2.msra.mxu0 0.0
        %941 = vmatprep.subr.mxu0 0.0
        %942 = vmatpush2.msra.mxu0 0.0
        %943 = vmatprep.subr.mxu0 0.0
        %944 = vmatpush2.msra.mxu0 0.0
        %945 = vmatprep.subr.mxu0 0.0
        %946 = vmatpush2.msra.mxu0 0.0
        %947 = vmatprep.subr.mxu0 0.0
        %948 = vmatpush2.msra.mxu0 0.0
        %949 = vmatprep.subr.mxu0 0.0
        %950 = vmatpush2.msra.mxu0 0.0
        %951 = vmatprep.subr.mxu0 0.0
        %952 = vmatpush2.msra.mxu0 0.0
        %953 = vmatprep.subr.mxu0 0.0
        %954 = vmatpush2.msra.mxu0 0.0
        %955 = vmatprep.subr.mxu0 0.0
        %956 = vmatpush2.msra.mxu0 0.0
        %957 = vmatprep.subr.mxu0 0.0
        %958 = vmatpush2.msra.mxu0 0.0
        %959 = vmatprep.subr.mxu0 0.0
        %960 = vmatpush2.msra.mxu0 0.0
        %961 = vmatprep.subr.mxu0 0.0
        %962 = vmatpush2.msra.mxu0 0.0
        %963 = vmatprep.mubr.f32.mxu0 0.0
        %964 = vmatmul.mubr.f32.gmra.mxu0 %v891
        %v965 = vpop.f32.mrf.mxu0
        %v966 = vadd.f32 %v877, %v965
        %v967 = vpop.f32.mrf.mxu0
        %968 = vmatprep.mubr.f32.mxu0 0.0
        %969 = vmatmul.mubr.f32.gmra.mxu0 %v894
        %v970 = vpop.f32.mrf.mxu0
        %v971 = vadd.f32 %v882, %v970
        %v972 = vpop.f32.mrf.mxu0
        %973 = vmatprep.mubr.f32.mxu0 0.0
        %974 = vmatmul.mubr.f32.gmra.mxu0 %v897
        %v975 = vpop.f32.mrf.mxu0
        %v976 = vadd.f32 %v887, %v975
        %v977 = vpop.f32.mrf.mxu0
        %978 = vdwg.mxu0
        %v979 = vld [vmem:[%s5] sm:$0x1]
        %v981 = vlaneseq
        %v982 = vshrl.u32 %v981, 7
        %v983 = vsub.s32 0, %v982
        %v984 = vrot.slane %v979, %v983
        %v986 = vadd.f32 %v966, %v984
        %v987 = vadd.f32 %v971, %v984
        %v988 = vadd.f32 %v976, %v984
        %v989 = vxor.u32 %v986, 2147483648
        %v990 = vxor.u32 %v987, 2147483648
        %v991 = vxor.u32 %v988, 2147483648
        %v992 = vmul.f32 %v989, 1.442695
        %v993 = vpow.pop %v992
        %v994 = vmul.f32 %v990, 1.442695
        %v995 = vpow.pop %v994
        %v996 = vmul.f32 %v991, 1.442695
        %v997 = vpow.pop %v996
        %v998 = vadd.f32 %v993, 1.0
        %v999 = vadd.f32 %v995, 1.0
        %v1000 = vadd.f32 %v997, 1.0
        %v1001 = vrcp.pop %v998
        %v1002 = vmul.f32 1.0, %v1001
        %v1003 = vrcp.pop %v999
        %v1004 = vmul.f32 1.0, %v1003
        %v1005 = vrcp.pop %v1000
        %v1006 = vmul.f32 1.0, %v1005
        %v1007 = vmul.f32 %v986, %v1002
        %v1008 = vmul.f32 %v987, %v1004
        %v1009 = vmul.f32 %v988, %v1006
        %v1010 = vld [vmem:[%s6] sm:$0xff]
        %v1011 = vld [vmem:[%s6 + $0x8] sm:$0xff]
        %v1012 = vld [vmem:[%s6 + $0x10] sm:$0xff]
        %v1013 = vld [vmem:[%s6 + $0x18] sm:$0xff]
        %v1014 = vld [vmem:[%s6 + $0x20] sm:$0xff]
        %v1015 = vld [vmem:[%s6 + $0x28] sm:$0xff]
        %v1016 = vld [vmem:[%s6 + $0x30] sm:$0xff]
        %v1017 = vld [vmem:[%s6 + $0x38] sm:$0xff]
        %v1018 = vld [vmem:[%s7] sm:$0x1]
        %v1020 = vlaneseq
        %v1021 = vshrl.u32 %v1020, 7
        %v1022 = vsub.s32 0, %v1021
        %v1023 = vrot.slane %v1018, %v1022
        %vm1025 = vcmask 523264
        %v1027 = vsel %vm1025, %v1007, 0
        %v1030 = vsel %vm1025, %v1008, 0
        %v1033 = vsel %vm1025, %v1009, 0
        %1035 = vmatprep.subr.mxu0 0.0
        %1036 = vmatpush1.msra.mxu0 0.0
        %1037 = vmatprep.subr.mxu0 0.0
        %1038 = vmatpush1.msra.mxu0 0.0
        %1039 = vmatprep.subr.mxu0 0.0
        %1040 = vmatpush1.msra.mxu0 0.0
        %1041 = vmatprep.subr.mxu0 0.0
        %1042 = vmatpush1.msra.mxu0 0.0
        %1043 = vmatprep.subr.mxu0 0.0
        %1044 = vmatpush1.msra.mxu0 0.0
        %1045 = vmatprep.subr.mxu0 0.0
        %1046 = vmatpush1.msra.mxu0 0.0
        %1047 = vmatprep.subr.mxu0 0.0
        %1048 = vmatpush1.msra.mxu0 0.0
        %1049 = vmatprep.subr.mxu0 0.0
        %1050 = vmatpush1.msra.mxu0 0.0
        %1051 = vmatprep.subr.mxu0 0.0
        %1052 = vmatpush1.msra.mxu0 %v1017
        %1053 = vmatprep.subr.mxu0 0.0
        %1054 = vmatpush1.msra.mxu0 %v1016
        %1055 = vmatprep.subr.mxu0 0.0
        %1056 = vmatpush1.msra.mxu0 %v1015
        %1057 = vmatprep.subr.mxu0 0.0
        %1058 = vmatpush1.msra.mxu0 %v1014
        %1059 = vmatprep.subr.mxu0 0.0
        %1060 = vmatpush1.msra.mxu0 %v1013
        %1061 = vmatprep.subr.mxu0 0.0
        %1062 = vmatpush1.msra.mxu0 %v1012
        %1063 = vmatprep.subr.mxu0 0.0
        %1064 = vmatpush1.msra.mxu0 %v1011
        %1065 = vmatprep.subr.mxu0 0.0
        %1066 = vmatpush1.msra.mxu0 %v1010
        %1067 = vmatprep.subr.mxu0 0.0
        %1068 = vmatpush2.msra.mxu0 0.0
        %1069 = vmatprep.subr.mxu0 0.0
        %1070 = vmatpush2.msra.mxu0 0.0
        %1071 = vmatprep.subr.mxu0 0.0
        %1072 = vmatpush2.msra.mxu0 0.0
        %1073 = vmatprep.subr.mxu0 0.0
        %1074 = vmatpush2.msra.mxu0 0.0
        %1075 = vmatprep.subr.mxu0 0.0
        %1076 = vmatpush2.msra.mxu0 0.0
        %1077 = vmatprep.subr.mxu0 0.0
        %1078 = vmatpush2.msra.mxu0 0.0
        %1079 = vmatprep.subr.mxu0 0.0
        %1080 = vmatpush2.msra.mxu0 0.0
        %1081 = vmatprep.subr.mxu0 0.0
        %1082 = vmatpush2.msra.mxu0 0.0
        %1083 = vmatprep.subr.mxu0 0.0
        %1084 = vmatpush2.msra.mxu0 0.0
        %1085 = vmatprep.subr.mxu0 0.0
        %1086 = vmatpush2.msra.mxu0 0.0
        %1087 = vmatprep.subr.mxu0 0.0
        %1088 = vmatpush2.msra.mxu0 0.0
        %1089 = vmatprep.subr.mxu0 0.0
        %1090 = vmatpush2.msra.mxu0 0.0
        %1091 = vmatprep.subr.mxu0 0.0
        %1092 = vmatpush2.msra.mxu0 0.0
        %1093 = vmatprep.subr.mxu0 0.0
        %1094 = vmatpush2.msra.mxu0 0.0
        %1095 = vmatprep.subr.mxu0 0.0
        %1096 = vmatpush2.msra.mxu0 0.0
        %1097 = vmatprep.subr.mxu0 0.0
        %1098 = vmatpush2.msra.mxu0 0.0
        %1099 = vmatprep.mubr.f32.mxu0 0.0
        %1100 = vmatmul.mubr.f32.gmra.mxu0 %v1027
        %v1101 = vpop.f32.mrf.mxu0
        %v1102 = vadd.f32 %v1023, %v1101
        %v1103 = vpop.f32.mrf.mxu0
        %1104 = vmatprep.mubr.f32.mxu0 0.0
        %1105 = vmatmul.mubr.f32.gmra.mxu0 %v1030
        %v1106 = vpop.f32.mrf.mxu0
        %v1107 = vadd.f32 %v1023, %v1106
        %v1108 = vpop.f32.mrf.mxu0
        %1109 = vmatprep.mubr.f32.mxu0 0.0
        %1110 = vmatmul.mubr.f32.gmra.mxu0 %v1033
        %v1111 = vpop.f32.mrf.mxu0
        %v1112 = vadd.f32 %v1023, %v1111
        %v1113 = vpop.f32.mrf.mxu0
        %1114 = vdwg.mxu0
        %v1115 = vxor.u32 %v1102, 2147483648
        %v1116 = vxor.u32 %v1107, 2147483648
        %v1117 = vxor.u32 %v1112, 2147483648
        %v1118 = vmul.f32 %v1115, 1.442695
        %v1119 = vpow.pop %v1118
        %v1120 = vmul.f32 %v1116, 1.442695
        %v1121 = vpow.pop %v1120
        %v1122 = vmul.f32 %v1117, 1.442695
        %v1123 = vpow.pop %v1122
        %v1124 = vadd.f32 %v1119, 1.0
        %v1125 = vadd.f32 %v1121, 1.0
        %v1126 = vadd.f32 %v1123, 1.0
        %v1127 = vrcp.pop %v1124
        %v1128 = vmul.f32 1.0, %v1127
        %v1129 = vrcp.pop %v1125
        %v1130 = vmul.f32 1.0, %v1129
        %v1131 = vrcp.pop %v1126
        %v1132 = vmul.f32 1.0, %v1131
        %v1133 = vmul.f32 %v1102, %v1128
        %v1134 = vmul.f32 %v1107, %v1130
        %v1135 = vmul.f32 %v1112, %v1132
        %v1136 = vmul.f32 %v1102, %v714
        %v1137 = vmul.f32 %v1107, %v719
        %v1138 = vmul.f32 %v1112, %v724
        %v1139 = vmul.f32 %v1102, %v729
        %v1140 = vmul.f32 %v1107, %v734
        %v1141 = vmul.f32 %v1112, %v739
        %v1142 = vmul.f32 %v1102, %v744
        %v1143 = vmul.f32 %v1107, %v749
        %v1144 = vmul.f32 %v1112, %v754
        %v1145 = vld [vmem:[%s8] sm:$0xff]
        %v1146 = vld [vmem:[%s8 + $0x8] sm:$0xff]
        %v1147 = vld [vmem:[%s8 + $0x10] sm:$0xff]
        %v1148 = vld [vmem:[%s8 + $0x18] sm:$0xff]
        %1158 = vrot.lane.b32.xlu0 %v1136, 96
        %v1159 = vpop.permute.xlu0 %1158
        %1160 = vrot.lane.b32.xlu0 %v1137, 96
        %v1161 = vpop.permute.xlu0 %1160
        %1162 = vrot.lane.b32.xlu0 %v1138, 96
        %v1163 = vpop.permute.xlu0 %1162
        %1164 = vrot.lane.b32.xlu0 %v1139, 96
        %v1165 = vpop.permute.xlu0 %1164
        %1166 = vrot.lane.b32.xlu0 %v1140, 96
        %v1167 = vpop.permute.xlu0 %1166
        %1168 = vrot.lane.b32.xlu0 %v1141, 96
        %v1169 = vpop.permute.xlu0 %1168
        %1170 = vrot.lane.b32.xlu0 %v1142, 96
        %v1171 = vpop.permute.xlu0 %1170
        %1172 = vrot.lane.b32.xlu0 %v1143, 96
        %v1173 = vpop.permute.xlu0 %1172
        %1174 = vrot.lane.b32.xlu0 %v1144, 96
        %v1175 = vpop.permute.xlu0 %1174
        %v1176 = vsel %vm619, %v1159, 0
        %v1178 = vsel %vm619, %v1161, 0
        %v1180 = vsel %vm619, %v1163, 0
        %v1182 = vsel %vm619, %v1165, 0
        %v1184 = vsel %vm619, %v1167, 0
        %v1186 = vsel %vm619, %v1169, 0
        %v1188 = vsel %vm619, %v1171, 0
        %v1190 = vsel %vm619, %v1173, 0
        %v1192 = vsel %vm619, %v1175, 0
        %1194 = vmatprep.subr.mxu0 0.0
        %1195 = vmatpush1.msra.mxu0 0.0
        %1196 = vmatprep.subr.mxu0 0.0
        %1197 = vmatpush1.msra.mxu0 0.0
        %1198 = vmatprep.subr.mxu0 0.0
        %1199 = vmatpush1.msra.mxu0 0.0
        %1200 = vmatprep.subr.mxu0 0.0
        %1201 = vmatpush1.msra.mxu0 0.0
        %1202 = vmatprep.subr.mxu0 0.0
        %1203 = vmatpush1.msra.mxu0 0.0
        %1204 = vmatprep.subr.mxu0 0.0
        %1205 = vmatpush1.msra.mxu0 0.0
        %1206 = vmatprep.subr.mxu0 0.0
        %1207 = vmatpush1.msra.mxu0 0.0
        %1208 = vmatprep.subr.mxu0 0.0
        %1209 = vmatpush1.msra.mxu0 0.0
        %1210 = vmatprep.subr.mxu0 0.0
        %1211 = vmatpush1.msra.mxu0 0.0
        %1212 = vmatprep.subr.mxu0 0.0
        %1213 = vmatpush1.msra.mxu0 0.0
        %1214 = vmatprep.subr.mxu0 0.0
        %1215 = vmatpush1.msra.mxu0 0.0
        %1216 = vmatprep.subr.mxu0 0.0
        %1217 = vmatpush1.msra.mxu0 0.0
        %1218 = vmatprep.subr.mxu0 0.0
        %1219 = vmatpush1.msra.mxu0 %v1148
        %1220 = vmatprep.subr.mxu0 0.0
        %1221 = vmatpush1.msra.mxu0 %v1147
        %1222 = vmatprep.subr.mxu0 0.0
        %1223 = vmatpush1.msra.mxu0 %v1146
        %1224 = vmatprep.subr.mxu0 0.0
        %1225 = vmatpush1.msra.mxu0 %v1145
        %1226 = vmatprep.subr.mxu0 0.0
        %1227 = vmatpush2.msra.mxu0 0.0
        %1228 = vmatprep.subr.mxu0 0.0
        %1229 = vmatpush2.msra.mxu0 0.0
        %1230 = vmatprep.subr.mxu0 0.0
        %1231 = vmatpush2.msra.mxu0 0.0
        %1232 = vmatprep.subr.mxu0 0.0
        %1233 = vmatpush2.msra.mxu0 0.0
        %1234 = vmatprep.subr.mxu0 0.0
        %1235 = vmatpush2.msra.mxu0 0.0
        %1236 = vmatprep.subr.mxu0 0.0
        %1237 = vmatpush2.msra.mxu0 0.0
        %1238 = vmatprep.subr.mxu0 0.0
        %1239 = vmatpush2.msra.mxu0 0.0
        %1240 = vmatprep.subr.mxu0 0.0
        %1241 = vmatpush2.msra.mxu0 0.0
        %1242 = vmatprep.subr.mxu0 0.0
        %1243 = vmatpush2.msra.mxu0 0.0
        %1244 = vmatprep.subr.mxu0 0.0
        %1245 = vmatpush2.msra.mxu0 0.0
        %1246 = vmatprep.subr.mxu0 0.0
        %1247 = vmatpush2.msra.mxu0 0.0
        %1248 = vmatprep.subr.mxu0 0.0
        %1249 = vmatpush2.msra.mxu0 0.0
        %1250 = vmatprep.subr.mxu0 0.0
        %1251 = vmatpush2.msra.mxu0 0.0
        %1252 = vmatprep.subr.mxu0 0.0
        %1253 = vmatpush2.msra.mxu0 0.0
        %1254 = vmatprep.subr.mxu0 0.0
        %1255 = vmatpush2.msra.mxu0 0.0
        %1256 = vmatprep.subr.mxu0 0.0
        %1257 = vmatpush2.msra.mxu0 0.0
        %1258 = vmatprep.mubr.f32.mxu0 0.0
        %1259 = vmatmul.mubr.f32.gmra.mxu0 %v1176
        %v1260 = vpop.f32.mrf.mxu0
        %v1261 = vadd.f32 0.0, %v1260
        %v1262 = vpop.f32.mrf.mxu0
        %1263 = vmatprep.mubr.f32.mxu0 0.0
        %1264 = vmatmul.mubr.f32.gmra.mxu0 %v1178
        %v1265 = vpop.f32.mrf.mxu0
        %v1266 = vadd.f32 0.0, %v1265
        %v1267 = vpop.f32.mrf.mxu0
        %1268 = vmatprep.mubr.f32.mxu0 0.0
        %1269 = vmatmul.mubr.f32.gmra.mxu0 %v1180
        %v1270 = vpop.f32.mrf.mxu0
        %v1271 = vadd.f32 0.0, %v1270
        %v1272 = vpop.f32.mrf.mxu0
        %1273 = vmatprep.mubr.f32.mxu0 0.0
        %1274 = vmatmul.mubr.f32.gmra.mxu0 %v1182
        %v1275 = vpop.f32.mrf.mxu0
        %v1276 = vadd.f32 0.0, %v1275
        %v1277 = vpop.f32.mrf.mxu0
        %1278 = vmatprep.mubr.f32.mxu0 0.0
        %1279 = vmatmul.mubr.f32.gmra.mxu0 %v1184
        %v1280 = vpop.f32.mrf.mxu0
        %v1281 = vadd.f32 0.0, %v1280
        %v1282 = vpop.f32.mrf.mxu0
        %1283 = vmatprep.mubr.f32.mxu0 0.0
        %1284 = vmatmul.mubr.f32.gmra.mxu0 %v1186
        %v1285 = vpop.f32.mrf.mxu0
        %v1286 = vadd.f32 0.0, %v1285
        %v1287 = vpop.f32.mrf.mxu0
        %1288 = vmatprep.mubr.f32.mxu0 0.0
        %1289 = vmatmul.mubr.f32.gmra.mxu0 %v1188
        %v1290 = vpop.f32.mrf.mxu0
        %v1291 = vadd.f32 0.0, %v1290
        %v1292 = vpop.f32.mrf.mxu0
        %1293 = vmatprep.mubr.f32.mxu0 0.0
        %1294 = vmatmul.mubr.f32.gmra.mxu0 %v1190
        %v1295 = vpop.f32.mrf.mxu0
        %v1296 = vadd.f32 0.0, %v1295
        %v1297 = vpop.f32.mrf.mxu0
        %1298 = vmatprep.mubr.f32.mxu0 0.0
        %1299 = vmatmul.mubr.f32.gmra.mxu0 %v1192
        %v1300 = vpop.f32.mrf.mxu0
        %v1301 = vadd.f32 0.0, %v1300
        %v1302 = vpop.f32.mrf.mxu0
        %1303 = vdwg.mxu0
        %v1304 = vmul.f32 %v1261, %v1261
        %v1305 = vmul.f32 %v1266, %v1266
        %v1306 = vmul.f32 %v1271, %v1271
        %v1307 = vmul.f32 %v1276, %v1276
        %v1308 = vmul.f32 %v1281, %v1281
        %v1309 = vmul.f32 %v1286, %v1286
        %v1310 = vadd.f32 %v1304, %v1307
        %v1311 = vadd.f32 %v1305, %v1308
        %v1312 = vadd.f32 %v1306, %v1309
        %v1313 = vmul.f32 %v1291, %v1291
        %v1314 = vmul.f32 %v1296, %v1296
        %v1315 = vmul.f32 %v1301, %v1301
        %v1316 = vadd.f32 %v1310, %v1313
        %v1317 = vadd.f32 %v1311, %v1314
        %v1318 = vadd.f32 %v1312, %v1315
        %v1319 = vrsqrt.pop %v1316
        %v1320 = vmul.f32 %v1316, %v1319
        %vm1321 = vcmp.eq.f32.partialorder %v1316, inf
        %v1322 = vsel %vm1321, %v1316, %v1320
        %vm1323 = vcmp.eq.f32.partialorder %v1316, 0.0
        %v1324 = vand.u32 %v1316, 2147483648
        %v1325 = vsel %vm1323, %v1324, %v1322
        %v1326 = vrsqrt.pop %v1317
        %v1327 = vmul.f32 %v1317, %v1326
        %vm1328 = vcmp.eq.f32.partialorder %v1317, inf
        %v1329 = vsel %vm1328, %v1317, %v1327
        %vm1330 = vcmp.eq.f32.partialorder %v1317, 0.0
        %v1331 = vand.u32 %v1317, 2147483648
        %v1332 = vsel %vm1330, %v1331, %v1329
        %v1333 = vrsqrt.pop %v1318
        %v1334 = vmul.f32 %v1318, %v1333
        %vm1335 = vcmp.eq.f32.partialorder %v1318, inf
        %v1336 = vsel %vm1335, %v1318, %v1334
        %vm1337 = vcmp.eq.f32.partialorder %v1318, 0.0
        %v1338 = vand.u32 %v1318, 2147483648
        %v1339 = vsel %vm1337, %v1338, %v1336
        %v1340 = vld [vmem:[%s9] sm:$0xff]
        %v1341 = vld [vmem:[%s9 + $0x8] sm:$0xff]
        %v1342 = vld [vmem:[%s9 + $0x10] sm:$0xff]
        %v1343 = vld [vmem:[%s9 + $0x18] sm:$0xff]
        %v1344 = vld [vmem:[%s10] sm:$0xff]
        %v1345 = vld [vmem:[%s10 + $0x8] sm:$0x1]
        %vm1346 = vcmask 72704
        %v1348 = vsel %vm1346, %v1325, 0
        %v1351 = vsel %vm1346, %v1332, 0
        %v1354 = vsel %vm1346, %v1339, 0
        %vm1356 = vcmask 1040384
        %v1358 = vsel %vm1356, %v1345, 0
        %1360 = vmatprep.subr.mxu0 0.0
        %1361 = vmatpush1.msra.mxu0 0.0
        %1362 = vmatprep.subr.mxu0 0.0
        %1363 = vmatpush1.msra.mxu0 0.0
        %1364 = vmatprep.subr.mxu0 0.0
        %1365 = vmatpush1.msra.mxu0 0.0
        %1366 = vmatprep.subr.mxu0 0.0
        %1367 = vmatpush1.msra.mxu0 0.0
        %1368 = vmatprep.subr.mxu0 0.0
        %1369 = vmatpush1.msra.mxu0 0.0
        %1370 = vmatprep.subr.mxu0 0.0
        %1371 = vmatpush1.msra.mxu0 0.0
        %1372 = vmatprep.subr.mxu0 0.0
        %1373 = vmatpush1.msra.mxu0 0.0
        %1374 = vmatprep.subr.mxu0 0.0
        %1375 = vmatpush1.msra.mxu0 0.0
        %1376 = vmatprep.subr.mxu0 0.0
        %1377 = vmatpush1.msra.mxu0 0.0
        %1378 = vmatprep.subr.mxu0 0.0
        %1379 = vmatpush1.msra.mxu0 0.0
        %1380 = vmatprep.subr.mxu0 0.0
        %1381 = vmatpush1.msra.mxu0 0.0
        %1382 = vmatprep.subr.mxu0 0.0
        %1383 = vmatpush1.msra.mxu0 0.0
        %1384 = vmatprep.subr.mxu0 0.0
        %1385 = vmatpush1.msra.mxu0 0.0
        %1386 = vmatprep.subr.mxu0 0.0
        %1387 = vmatpush1.msra.mxu0 0.0
        %1388 = vmatprep.subr.mxu0 0.0
        %1389 = vmatpush1.msra.mxu0 %v1358
        %1390 = vmatprep.subr.mxu0 0.0
        %1391 = vmatpush1.msra.mxu0 %v1344
        %1392 = vmatprep.subr.mxu0 0.0
        %1393 = vmatpush2.msra.mxu0 0.0
        %1394 = vmatprep.subr.mxu0 0.0
        %1395 = vmatpush2.msra.mxu0 0.0
        %1396 = vmatprep.subr.mxu0 0.0
        %1397 = vmatpush2.msra.mxu0 0.0
        %1398 = vmatprep.subr.mxu0 0.0
        %1399 = vmatpush2.msra.mxu0 0.0
        %1400 = vmatprep.subr.mxu0 0.0
        %1401 = vmatpush2.msra.mxu0 0.0
        %1402 = vmatprep.subr.mxu0 0.0
        %1403 = vmatpush2.msra.mxu0 0.0
        %1404 = vmatprep.subr.mxu0 0.0
        %1405 = vmatpush2.msra.mxu0 0.0
        %1406 = vmatprep.subr.mxu0 0.0
        %1407 = vmatpush2.msra.mxu0 0.0
        %1408 = vmatprep.subr.mxu0 0.0
        %1409 = vmatpush2.msra.mxu0 0.0
        %1410 = vmatprep.subr.mxu0 0.0
        %1411 = vmatpush2.msra.mxu0 0.0
        %1412 = vmatprep.subr.mxu0 0.0
        %1413 = vmatpush2.msra.mxu0 0.0
        %1414 = vmatprep.subr.mxu0 0.0
        %1415 = vmatpush2.msra.mxu0 0.0
        %1416 = vmatprep.subr.mxu0 0.0
        %1417 = vmatpush2.msra.mxu0 0.0
        %1418 = vmatprep.subr.mxu0 0.0
        %1419 = vmatpush2.msra.mxu0 0.0
        %1420 = vmatprep.subr.mxu0 0.0
        %1421 = vmatpush2.msra.mxu0 0.0
        %1422 = vmatprep.subr.mxu0 0.0
        %1423 = vmatpush2.msra.mxu0 0.0
        %1424 = vmatprep.mubr.f32.mxu0 0.0
        %1425 = vmatmul.mubr.f32.gmra.mxu0 %v1348
        %v1426 = vpop.f32.mrf.mxu0
        %v1427 = vadd.f32 0.0, %v1426
        %v1428 = vpop.f32.mrf.mxu0
        %1429 = vmatprep.mubr.f32.mxu0 0.0
        %1430 = vmatmul.mubr.f32.gmra.mxu0 %v1351
        %v1431 = vpop.f32.mrf.mxu0
        %v1432 = vadd.f32 0.0, %v1431
        %v1433 = vpop.f32.mrf.mxu0
        %1434 = vmatprep.mubr.f32.mxu0 0.0
        %1435 = vmatmul.mubr.f32.gmra.mxu0 %v1354
        %v1436 = vpop.f32.mrf.mxu0
        %v1437 = vadd.f32 0.0, %v1436
        %v1438 = vpop.f32.mrf.mxu0
        %1439 = vdwg.mxu0
        %v1441 = vsel %vm619, %v1133, 0
        %v1444 = vsel %vm619, %v1134, 0
        %v1447 = vsel %vm619, %v1135, 0
        %1449 = vmatprep.subr.mxu0 0.0
        %1450 = vmatpush1.msra.mxu0 0.0
        %1451 = vmatprep.subr.mxu0 0.0
        %1452 = vmatpush1.msra.mxu0 0.0
        %1453 = vmatprep.subr.mxu0 0.0
        %1454 = vmatpush1.msra.mxu0 0.0
        %1455 = vmatprep.subr.mxu0 0.0
        %1456 = vmatpush1.msra.mxu0 0.0
        %1457 = vmatprep.subr.mxu0 0.0
        %1458 = vmatpush1.msra.mxu0 0.0
        %1459 = vmatprep.subr.mxu0 0.0
        %1460 = vmatpush1.msra.mxu0 0.0
        %1461 = vmatprep.subr.mxu0 0.0
        %1462 = vmatpush1.msra.mxu0 0.0
        %1463 = vmatprep.subr.mxu0 0.0
        %1464 = vmatpush1.msra.mxu0 0.0
        %1465 = vmatprep.subr.mxu0 0.0
        %1466 = vmatpush1.msra.mxu0 0.0
        %1467 = vmatprep.subr.mxu0 0.0
        %1468 = vmatpush1.msra.mxu0 0.0
        %1469 = vmatprep.subr.mxu0 0.0
        %1470 = vmatpush1.msra.mxu0 0.0
        %1471 = vmatprep.subr.mxu0 0.0
        %1472 = vmatpush1.msra.mxu0 0.0
        %1473 = vmatprep.subr.mxu0 0.0
        %1474 = vmatpush1.msra.mxu0 %v1343
        %1475 = vmatprep.subr.mxu0 0.0
        %1476 = vmatpush1.msra.mxu0 %v1342
        %1477 = vmatprep.subr.mxu0 0.0
        %1478 = vmatpush1.msra.mxu0 %v1341
        %1479 = vmatprep.subr.mxu0 0.0
        %1480 = vmatpush1.msra.mxu0 %v1340
        %1481 = vmatprep.subr.mxu0 0.0
        %1482 = vmatpush2.msra.mxu0 0.0
        %1483 = vmatprep.subr.mxu0 0.0
        %1484 = vmatpush2.msra.mxu0 0.0
        %1485 = vmatprep.subr.mxu0 0.0
        %1486 = vmatpush2.msra.mxu0 0.0
        %1487 = vmatprep.subr.mxu0 0.0
        %1488 = vmatpush2.msra.mxu0 0.0
        %1489 = vmatprep.subr.mxu0 0.0
        %1490 = vmatpush2.msra.mxu0 0.0
        %1491 = vmatprep.subr.mxu0 0.0
        %1492 = vmatpush2.msra.mxu0 0.0
        %1493 = vmatprep.subr.mxu0 0.0
        %1494 = vmatpush2.msra.mxu0 0.0
        %1495 = vmatprep.subr.mxu0 0.0
        %1496 = vmatpush2.msra.mxu0 0.0
        %1497 = vmatprep.subr.mxu0 0.0
        %1498 = vmatpush2.msra.mxu0 0.0
        %1499 = vmatprep.subr.mxu0 0.0
        %1500 = vmatpush2.msra.mxu0 0.0
        %1501 = vmatprep.subr.mxu0 0.0
        %1502 = vmatpush2.msra.mxu0 0.0
        %1503 = vmatprep.subr.mxu0 0.0
        %1504 = vmatpush2.msra.mxu0 0.0
        %1505 = vmatprep.subr.mxu0 0.0
        %1506 = vmatpush2.msra.mxu0 0.0
        %1507 = vmatprep.subr.mxu0 0.0
        %1508 = vmatpush2.msra.mxu0 0.0
        %1509 = vmatprep.subr.mxu0 0.0
        %1510 = vmatpush2.msra.mxu0 0.0
        %1511 = vmatprep.subr.mxu0 0.0
        %1512 = vmatpush2.msra.mxu0 0.0
        %1513 = vmatprep.mubr.f32.mxu0 0.0
        %1514 = vmatmul.mubr.f32.gmra.mxu0 %v1441
        %v1515 = vpop.f32.mrf.mxu0
        %v1516 = vadd.f32 %v1427, %v1515
        %v1517 = vpop.f32.mrf.mxu0
        %1518 = vmatprep.mubr.f32.mxu0 0.0
        %1519 = vmatmul.mubr.f32.gmra.mxu0 %v1444
        %v1520 = vpop.f32.mrf.mxu0
        %v1521 = vadd.f32 %v1432, %v1520
        %v1522 = vpop.f32.mrf.mxu0
        %1523 = vmatprep.mubr.f32.mxu0 0.0
        %1524 = vmatmul.mubr.f32.gmra.mxu0 %v1447
        %v1525 = vpop.f32.mrf.mxu0
        %v1526 = vadd.f32 %v1437, %v1525
        %v1527 = vpop.f32.mrf.mxu0
        %1528 = vdwg.mxu0
        %v1529 = vld [vmem:[%s11] sm:$0x1]
        %v1531 = vlaneseq
        %v1532 = vshrl.u32 %v1531, 7
        %v1533 = vsub.s32 0, %v1532
        %v1534 = vrot.slane %v1529, %v1533
        %v1536 = vadd.f32 %v1516, %v1534
        %v1537 = vadd.f32 %v1521, %v1534
        %v1538 = vadd.f32 %v1526, %v1534
        %v1539 = vxor.u32 %v1536, 2147483648
        %v1540 = vxor.u32 %v1537, 2147483648
        %v1541 = vxor.u32 %v1538, 2147483648
        %v1542 = vmul.f32 %v1539, 1.442695
        %v1543 = vpow.pop %v1542
        %v1544 = vmul.f32 %v1540, 1.442695
        %v1545 = vpow.pop %v1544
        %v1546 = vmul.f32 %v1541, 1.442695
        %v1547 = vpow.pop %v1546
        %v1548 = vadd.f32 %v1543, 1.0
        %v1549 = vadd.f32 %v1545, 1.0
        %v1550 = vadd.f32 %v1547, 1.0
        %v1551 = vrcp.pop %v1548
        %v1552 = vmul.f32 1.0, %v1551
        %v1553 = vrcp.pop %v1549
        %v1554 = vmul.f32 1.0, %v1553
        %v1555 = vrcp.pop %v1550
        %v1556 = vmul.f32 1.0, %v1555
        %v1557 = vmul.f32 %v1536, %v1552
        %v1558 = vmul.f32 %v1537, %v1554
        %v1559 = vmul.f32 %v1538, %v1556
        %v1560 = vld [vmem:[%s12] sm:$0xff]
        %v1561 = vld [vmem:[%s12 + $0x8] sm:$0xff]
        %v1562 = vld [vmem:[%s12 + $0x10] sm:$0xff]
        %v1563 = vld [vmem:[%s12 + $0x18] sm:$0xff]
        %v1564 = vld [vmem:[%s13] sm:$0x1]
        %v1566 = vlaneseq
        %v1567 = vshrl.u32 %v1566, 7
        %v1568 = vsub.s32 0, %v1567
        %v1569 = vrot.slane %v1564, %v1568
        %v1572 = vsel %vm619, %v1557, 0
        %v1575 = vsel %vm619, %v1558, 0
        %v1578 = vsel %vm619, %v1559, 0
        %1580 = vmatprep.subr.mxu0 0.0
        %1581 = vmatpush1.msra.mxu0 0.0
        %1582 = vmatprep.subr.mxu0 0.0
        %1583 = vmatpush1.msra.mxu0 0.0
        %1584 = vmatprep.subr.mxu0 0.0
        %1585 = vmatpush1.msra.mxu0 0.0
        %1586 = vmatprep.subr.mxu0 0.0
        %1587 = vmatpush1.msra.mxu0 0.0
        %1588 = vmatprep.subr.mxu0 0.0
        %1589 = vmatpush1.msra.mxu0 0.0
        %1590 = vmatprep.subr.mxu0 0.0
        %1591 = vmatpush1.msra.mxu0 0.0
        %1592 = vmatprep.subr.mxu0 0.0
        %1593 = vmatpush1.msra.mxu0 0.0
        %1594 = vmatprep.subr.mxu0 0.0
        %1595 = vmatpush1.msra.mxu0 0.0
        %1596 = vmatprep.subr.mxu0 0.0
        %1597 = vmatpush1.msra.mxu0 0.0
        %1598 = vmatprep.subr.mxu0 0.0
        %1599 = vmatpush1.msra.mxu0 0.0
        %1600 = vmatprep.subr.mxu0 0.0
        %1601 = vmatpush1.msra.mxu0 0.0
        %1602 = vmatprep.subr.mxu0 0.0
        %1603 = vmatpush1.msra.mxu0 0.0
        %1604 = vmatprep.subr.mxu0 0.0
        %1605 = vmatpush1.msra.mxu0 %v1563
        %1606 = vmatprep.subr.mxu0 0.0
        %1607 = vmatpush1.msra.mxu0 %v1562
        %1608 = vmatprep.subr.mxu0 0.0
        %1609 = vmatpush1.msra.mxu0 %v1561
        %1610 = vmatprep.subr.mxu0 0.0
        %1611 = vmatpush1.msra.mxu0 %v1560
        %1612 = vmatprep.subr.mxu0 0.0
        %1613 = vmatpush2.msra.mxu0 0.0
        %1614 = vmatprep.subr.mxu0 0.0
        %1615 = vmatpush2.msra.mxu0 0.0
        %1616 = vmatprep.subr.mxu0 0.0
        %1617 = vmatpush2.msra.mxu0 0.0
        %1618 = vmatprep.subr.mxu0 0.0
        %1619 = vmatpush2.msra.mxu0 0.0
        %1620 = vmatprep.subr.mxu0 0.0
        %1621 = vmatpush2.msra.mxu0 0.0
        %1622 = vmatprep.subr.mxu0 0.0
        %1623 = vmatpush2.msra.mxu0 0.0
        %1624 = vmatprep.subr.mxu0 0.0
        %1625 = vmatpush2.msra.mxu0 0.0
        %1626 = vmatprep.subr.mxu0 0.0
        %1627 = vmatpush2.msra.mxu0 0.0
        %1628 = vmatprep.subr.mxu0 0.0
        %1629 = vmatpush2.msra.mxu0 0.0
        %1630 = vmatprep.subr.mxu0 0.0
        %1631 = vmatpush2.msra.mxu0 0.0
        %1632 = vmatprep.subr.mxu0 0.0
        %1633 = vmatpush2.msra.mxu0 0.0
        %1634 = vmatprep.subr.mxu0 0.0
        %1635 = vmatpush2.msra.mxu0 0.0
        %1636 = vmatprep.subr.mxu0 0.0
        %1637 = vmatpush2.msra.mxu0 0.0
        %1638 = vmatprep.subr.mxu0 0.0
        %1639 = vmatpush2.msra.mxu0 0.0
        %1640 = vmatprep.subr.mxu0 0.0
        %1641 = vmatpush2.msra.mxu0 0.0
        %1642 = vmatprep.subr.mxu0 0.0
        %1643 = vmatpush2.msra.mxu0 0.0
        %1644 = vmatprep.mubr.f32.mxu0 0.0
        %1645 = vmatmul.mubr.f32.gmra.mxu0 %v1572
        %v1646 = vpop.f32.mrf.mxu0
        %v1647 = vadd.f32 %v1569, %v1646
        %v1648 = vpop.f32.mrf.mxu0
        %1649 = vmatprep.mubr.f32.mxu0 0.0
        %1650 = vmatmul.mubr.f32.gmra.mxu0 %v1575
        %v1651 = vpop.f32.mrf.mxu0
        %v1652 = vadd.f32 %v1569, %v1651
        %v1653 = vpop.f32.mrf.mxu0
        %1654 = vmatprep.mubr.f32.mxu0 0.0
        %1655 = vmatmul.mubr.f32.gmra.mxu0 %v1578
        %v1656 = vpop.f32.mrf.mxu0
        %v1657 = vadd.f32 %v1569, %v1656
        %v1658 = vpop.f32.mrf.mxu0
        %1659 = vdwg.mxu0
        %1663 = vrot.lane.b32.xlu0 %v1261, 122
        %v1664 = vpop.permute.xlu0 %1663
        %1665 = vrot.lane.b32.xlu0 %v1266, 122
        %v1666 = vpop.permute.xlu0 %1665
        %1667 = vrot.lane.b32.xlu0 %v1271, 122
        %v1668 = vpop.permute.xlu0 %1667
        %v1672 = vmul.f32 %v1647, %v1664
        %v1673 = vmul.f32 %v1652, %v1666
        %v1674 = vmul.f32 %v1657, %v1668
        %1678 = vrot.lane.b32.xlu0 %v1276, 122
        %v1679 = vpop.permute.xlu0 %1678
        %1680 = vrot.lane.b32.xlu0 %v1281, 122
        %v1681 = vpop.permute.xlu0 %1680
        %1682 = vrot.lane.b32.xlu0 %v1286, 122
        %v1683 = vpop.permute.xlu0 %1682
        %v1687 = vmul.f32 %v1647, %v1679
        %v1688 = vmul.f32 %v1652, %v1681
        %v1689 = vmul.f32 %v1657, %v1683
        %1693 = vrot.lane.b32.xlu0 %v1291, 122
        %v1694 = vpop.permute.xlu0 %1693
        %1695 = vrot.lane.b32.xlu0 %v1296, 122
        %v1696 = vpop.permute.xlu0 %1695
        %1697 = vrot.lane.b32.xlu0 %v1301, 122
        %v1698 = vpop.permute.xlu0 %1697
        %v1702 = vmul.f32 %v1647, %v1694
        %v1703 = vmul.f32 %v1652, %v1696
        %v1704 = vmul.f32 %v1657, %v1698
        %1708 = vrot.lane.b32.xlu0 %v1672, 125
        %v1709 = vpop.permute.xlu0 %1708
        %1710 = vrot.lane.b32.xlu0 %v1673, 125
        %v1711 = vpop.permute.xlu0 %1710
        %1712 = vrot.lane.b32.xlu0 %v1674, 125
        %v1713 = vpop.permute.xlu0 %1712
        %1720 = vrot.lane.b32.xlu0 %v1687, 3
        %v1721 = vpop.permute.xlu0 %1720
        %1722 = vrot.lane.b32.xlu0 %v1688, 3
        %v1723 = vpop.permute.xlu0 %1722
        %1724 = vrot.lane.b32.xlu0 %v1689, 3
        %v1725 = vpop.permute.xlu0 %1724
        %1732 = vrot.lane.b32.xlu0 %v1702, 9
        %v1733 = vpop.permute.xlu0 %1732
        %1734 = vrot.lane.b32.xlu0 %v1703, 9
        %v1735 = vpop.permute.xlu0 %1734
        %1736 = vrot.lane.b32.xlu0 %v1704, 9
        %v1737 = vpop.permute.xlu0 %1736
        %vm1741 = vcmask 48128
        %v1742 = vsel %vm1741, %v1709, %v1721
        %v1743 = vsel %vm1741, %v1711, %v1723
        %v1744 = vsel %vm1741, %v1713, %v1725
        %vm1745 = vcmask 97280
        %v1746 = vsel %vm1745, %v1742, %v1733
        %v1747 = vsel %vm1745, %v1743, %v1735
        %v1748 = vsel %vm1745, %v1744, %v1737
        %vm1749 = vcmask 23552
        %1750 = vst.msk [vmem:[%s593] sm:$0xff] %vm1749, %v1647
        %1751 = vst.msk [vmem:[%s593 + $0x8] sm:$0xff] %vm1749, %v1652
        %1752 = vst.msk [vmem:[%s593 + $0x10] sm:$0xff] %vm1749, %v1657
        %vm1753 = vcmask 146432
        %1754 = vst.msk [vmem:[%s599] sm:$0xff] %vm1753, %v1746
        %1755 = vst.msk [vmem:[%s599 + $0x8] sm:$0xff] %vm1753, %v1747
        %1756 = vst.msk [vmem:[%s599 + $0x10] sm:$0xff] %vm1753, %v1748
        %s1757 = smul.u32 3, %s27
        %p1758 = scmp.lt.s32.totalorder %s1757, 5
        %s1759 = scalar_select %p1758, %s1757, 5
        %s1760 = smul.addr %s1759, 8
        %s1761 = scalar_lea.vmem %s14, %s1760
        %s1762 = smul.u32 3, %s27
        %p1763 = scmp.lt.s32.totalorder %s1762, 5
        %s1764 = scalar_select %p1763, %s1762, 5
        %s1765 = smul.addr %s1764, 8
        %s1766 = scalar_lea.vmem %s15, %s1765
        // Predicated region
        $region115: #{tpu_custom_call.1} parent=109 // pred_check
          %p1767 = pneg %p349
        $region116: #{tpu_custom_call.1} parent=109 // pred_check_branch
          %1769 = sbr.rel (%p1767) target = $region118
        $region117: #{tpu_custom_call.1} parent=109 // pred_region
          %s1770 = smul.u32 3, %s27
        $region118: #{tpu_custom_call.1} parent=109 // pred_fallthru
          _
        // Predicated region
        $region119: #{tpu_custom_call.1} parent=109 // pred_check
          %p1771 = pneg %p375
        $region120: #{tpu_custom_call.1} parent=109 // pred_check_branch
          %1773 = sbr.rel (%p1771) target = $region122
        $region121: #{tpu_custom_call.1} parent=109 // pred_region
          %s1774 = smul.u32 3, %s27
        $region122: #{tpu_custom_call.1} parent=109 // pred_fallthru
          _
      $region110: #{tpu_custom_call.1} parent=5 // pred_fallthru
        _
      %p1775 = scmp.le.s32.totalorder 2, %s22
      // Predicated region
      $region123: #{tpu_custom_call.1} parent=5 // pred_check
        %p1776 = pneg %p1775
      $region124: #{tpu_custom_call.1} parent=5 // pred_check_branch
        %1778 = sbr.rel (%p1776) target = $region126
      $region125: #{tpu_custom_call.1} parent=5 // pred_region
        %s1779 = ssub.s32 %s22, 2
        // Predicated region
        $region127: #{tpu_custom_call.1} parent=125 // pred_check
          %p1780 = pneg %p355
        $region128: #{tpu_custom_call.1} parent=125 // pred_check_branch
          %1782 = sbr.rel (%p1780) target = $region130
        $region129: #{tpu_custom_call.1} parent=125 // pred_region
          %s1783 = smul.u32 3, %s28
          %p1784 = scmp.lt.s32.totalorder %s1783, 5
          %s1785 = scalar_select %p1784, %s1783, 5
          %s1786 = smul.addr %s1785, 8
          %s1787 = scalar_lea.vmem %s14, %s1786
        $region130: #{tpu_custom_call.1} parent=125 // pred_fallthru
          _
        // Predicated region
        $region131: #{tpu_custom_call.1} parent=125 // pred_check
          %p1788 = pneg %p381
        $region132: #{tpu_custom_call.1} parent=125 // pred_check_branch
          %1790 = sbr.rel (%p1788) target = $region134
        $region133: #{tpu_custom_call.1} parent=125 // pred_region
          %s1791 = smul.u32 3, %s28
          %p1792 = scmp.lt.s32.totalorder %s1791, 5
          %s1793 = scalar_select %p1792, %s1791, 5
          %s1794 = smul.addr %s1793, 8
          %s1795 = scalar_lea.vmem %s15, %s1794
        $region134: #{tpu_custom_call.1} parent=125 // pred_fallthru
          _
      $region126: #{tpu_custom_call.1} parent=5 // pred_fallthru
        _
    $region6: #{tpu_custom_call.1} parent=1 // loop_footer
      %s26 = sadd.s32 1, %s22
    $region7: #{tpu_custom_call.1} parent=1 // loop_footer_branch
      %21 = sbr.rel target = $region3
    $region8: #{tpu_custom_call.1} parent=1 // loop_exit
      _

</llo_original>
